<compile_context>
chip_gen: v6e
topology: v6e:2x2x1
jax: 0.10.0
libtpu: 0.0.40
codegen_flags: <defaults>
</compile_context>

<pallas_src>
import functools

import jax
import jax.numpy as jnp
from jax.experimental import pallas as pl
from jax.experimental.pallas import tpu as pltpu

_LANE = 128


def _round_up(x, m):
    return ((x + m - 1) // m) * m


def _pad2d(x, rows, cols, dtype):
    x = jnp.asarray(x, dtype)
    return jnp.pad(x, ((0, rows - x.shape[0]), (0, cols - x.shape[1])))


# --------------------------------------------------------------------------- #
# Kernel 1:  p = relu( A @ (X @ W1.T) + b1 ) @ W2.T        (output bf16)
#   grid = (rows, K). A is streamed f32 and cast to bf16 in-kernel; XW1 is
#   VMEM-resident and sliced per k-step; the tiny channel projection + ReLU
#   run once per row tile at the last K step.
# --------------------------------------------------------------------------- #
def layer1_kernel(a_ref, xw1_ref, b1_ref, w2_ref, p_ref, acc_ref, *, n, tk, mask_k):
    k = pl.program_id(1)

    @pl.when(k == 0)
    def _():
        acc_ref[...] = jnp.zeros_like(acc_ref)

    a = a_ref[...]
    if mask_k:  # static: only emitted when N is not a multiple of tk
        col = jax.lax.broadcasted_iota(jnp.int32, a.shape, 1)
        a = jnp.where(col < n - k * tk, a, 0.0)   # zero garbage boundary cols
    start = pl.multiple_of(k * tk, tk)
    acc_ref[...] += jnp.dot(a.astype(jnp.bfloat16),
                            xw1_ref[pl.ds(start, tk), :],
                            preferred_element_type=jnp.float32)

    @pl.when(k == pl.num_programs(1) - 1)
    def _():
        h = jnp.maximum(acc_ref[...] + b1_ref[...], 0.0)
        p = jnp.dot(h.astype(jnp.bfloat16), w2_ref[...],
                    preferred_element_type=jnp.float32)
        p_ref[...] = p.astype(p_ref.dtype)


# --------------------------------------------------------------------------- #
# Kernel 2:  out = softmax( A @ p + b2 )   (pad lanes masked with -inf)
# --------------------------------------------------------------------------- #
def layer2_kernel(a_ref, p_ref, b2_ref, o_ref, acc_ref, *, n, tk, mask_k, c_out):
    k = pl.program_id(1)

    @pl.when(k == 0)
    def _():
        acc_ref[...] = jnp.zeros_like(acc_ref)

    a = a_ref[...]
    if mask_k:
        col = jax.lax.broadcasted_iota(jnp.int32, a.shape, 1)
        a = jnp.where(col < n - k * tk, a, 0.0)
    start = pl.multiple_of(k * tk, tk)
    acc_ref[...] += jnp.dot(a.astype(jnp.bfloat16),
                            p_ref[pl.ds(start, tk), :],
                            preferred_element_type=jnp.float32)

    @pl.when(k == pl.num_programs(1) - 1)
    def _():
        z = acc_ref[...] + b2_ref[...]
        lane = jax.lax.broadcasted_iota(jnp.int32, z.shape, 1)
        z = jnp.where(lane < c_out, z, -jnp.inf)          # mask pad columns
        z_max = jnp.max(z, axis=-1, keepdims=True)
        e = jnp.exp(z - z_max)
        # Exact normalization (runs once per row tile -> negligible cost).
        o_ref[...] = (e / jnp.sum(e, axis=-1, keepdims=True)).astype(o_ref.dtype)


# --------------------------------------------------------------------------- #
# Wrapper
# --------------------------------------------------------------------------- #
def two_layer_gcn(hadamard_product, features, w1, b1, w2, b2, *, tm=512, tk=512):
    """hadamard_product: [N, N]; features: [N, Cin];
    w1: [Chid, Cin], b1: [Chid]; w2: [Cout, Chid], b2: [Cout] (PyTorch Linear layout)."""
    a = jnp.asarray(hadamard_product, jnp.float32)   # streamed as-is (no N^2 copy)
    x = jnp.asarray(features, jnp.float32)
    n = a.shape[0]
    c_in, c_hid, c_out = x.shape[1], w1.shape[0], w2.shape[0]

    # bf16 blocks need (16,128) sublane/lane tiling; 128 keeps every slice aligned.
    assert tm % 128 == 0 and tk % 128 == 0, "tile sizes must be multiples of 128"

    c_hid_p = _round_up(c_hid, _LANE)
    c_out_p = _round_up(c_out, _LANE)
    n_k_p = _round_up(n, tk)            # row count of the resident second operand

    # Tiny precomputes (O(N*C), << N^2 traffic): layer-1 channel projection and
    # zero-padded params. Zero pad rows/lanes keep the reduction exact.
    xw1 = jnp.dot(x, jnp.asarray(w1, jnp.float32).T)                     # [N, Chid]
    xw1_p = _pad2d(xw1, n_k_p, c_hid_p, jnp.bfloat16)
    w2_p = _pad2d(jnp.asarray(w2, jnp.float32).T, c_hid_p, c_out_p, jnp.bfloat16)
    b1_p = _pad2d(jnp.asarray(b1, jnp.float32).reshape(1, -1), 1, c_hid_p, jnp.float32)
    b2_p = _pad2d(jnp.asarray(b2, jnp.float32).reshape(1, -1), 1, c_out_p, jnp.float32)

    grid = (pl.cdiv(n, tm), pl.cdiv(n, tk))
    mask_k = (n % tk) != 0
    cparams = pltpu.CompilerParams(
        dimension_semantics=("parallel", "arbitrary"),
        vmem_limit_bytes=48 * 1024 * 1024,   # <= ~56 MiB keeps v7x (64 MiB VMEM) safe
    )

    # ---- layer 1 (+ fused Cout projection): p = relu(A @ XW1 + b1) @ W2.T ----
    p = pl.pallas_call(
        functools.partial(layer1_kernel, n=n, tk=tk, mask_k=mask_k),
        out_shape=jax.ShapeDtypeStruct((n, c_out_p), jnp.bfloat16),
        grid_spec=pltpu.PrefetchScalarGridSpec(
            num_scalar_prefetch=0,
            grid=grid,
            in_specs=[
                pl.BlockSpec((tm, tk), lambda i, k: (i, k)),            # A (f32, streamed)
                pl.BlockSpec((n_k_p, c_hid_p), lambda i, k: (0, 0)),    # XW1 (VMEM resident)
                pl.BlockSpec((1, c_hid_p), lambda i, k: (0, 0)),        # b1
                pl.BlockSpec((c_hid_p, c_out_p), lambda i, k: (0, 0)),  # W2.T (resident)
            ],
            out_specs=pl.BlockSpec((tm, c_out_p), lambda i, k: (i, 0)),
            scratch_shapes=[pltpu.VMEM((tm, c_hid_p), jnp.float32)],
        ),
        compiler_params=cparams,
    )(a, xw1_p, b1_p, w2_p)

    # Kernel 2 slices p with pl.ds up to n_k_p rows; supply exact-zero pad rows
    # (tiny [N,128] bf16 pad -- negligible traffic).
    if n_k_p > n:
        p = jnp.pad(p, ((0, n_k_p - n), (0, 0)))

    # ---- layer 2: out = softmax(A @ p + b2) ----
    out = pl.pallas_call(
        functools.partial(layer2_kernel, n=n, tk=tk, mask_k=mask_k, c_out=c_out),
        out_shape=jax.ShapeDtypeStruct((n, c_out_p), jnp.float32),
        grid_spec=pltpu.PrefetchScalarGridSpec(
            num_scalar_prefetch=0,
            grid=grid,
            in_specs=[
                pl.BlockSpec((tm, tk), lambda i, k: (i, k)),            # A (f32, streamed)
                pl.BlockSpec((n_k_p, c_out_p), lambda i, k: (0, 0)),    # p (VMEM resident)
                pl.BlockSpec((1, c_out_p), lambda i, k: (0, 0)),        # b2
            ],
            out_specs=pl.BlockSpec((tm, c_out_p), lambda i, k: (i, 0)),
            scratch_shapes=[pltpu.VMEM((tm, c_out_p), jnp.float32)],
        ),
        compiler_params=cparams,
    )(a, p, b2_p)

    return out[:, :c_out]


def _reference(a, x, w1, b1, w2, b2):
    h = jnp.maximum(jnp.dot(jnp.dot(a, x), w1.T) + b1, 0.0)
    z = jnp.dot(jnp.dot(a, h), w2.T) + b2
    return jax.nn.softmax(z, axis=-1)


if __name__ == "__main__":
    # Small, module-consistent shapes (non-multiple N exercises boundary masking).
    num_nodes = 300
    in_channels = 16
    hidden_channels = 32
    out_channels = 8

    key = jax.random.PRNGKey(0)
    k_a, k_x, k_w1, k_b1, k_w2, k_b2 = jax.random.split(key, 6)

    # Mean-normalized adjacency keeps logits O(1), which is both GCN-realistic
    # and keeps the bf16-input matmuls well within a 2e-2 tolerance vs f32.
    hadamard_product = (
        jax.random.uniform(k_a, (num_nodes, num_nodes), jnp.float32) / num_nodes
    )
    features = jax.random.normal(k_x, (num_nodes, in_channels), jnp.float32)

    # Deterministic parameter init (shapes follow nn.Linear in CustomGCNLayer).
    w1 = jax.random.normal(k_w1, (hidden_channels, in_channels), jnp.float32) * 0.1
    b1 = jax.random.normal(k_b1, (hidden_channels,), jnp.float32) * 0.1
    w2 = jax.random.normal(k_w2, (out_channels, hidden_channels), jnp.float32) * 0.1
    b2 = jax.random.normal(k_b2, (out_channels,), jnp.float32) * 0.1

    out = two_layer_gcn(hadamard_product, features, w1, b1, w2, b2, tm=512, tk=512)
    out = jax.block_until_ready(out)

    ref = _reference(hadamard_product, features, w1, b1, w2, b2)
    assert out.shape == (num_nodes, out_channels)
    assert jnp.allclose(out, ref, atol=2e-2, rtol=2e-2), "mismatch vs reference"
    assert jnp.allclose(jnp.sum(out, axis=-1), 1.0, atol=1e-3), "softmax rows must sum to 1"

    print("KERNEL_OK")
</pallas_src>

<mosaic_0001>
module attributes {stable_mosaic.version = 11 : i64} {
  func.func @layer1_kernel(%arg0: i32, %arg1: i32, %arg2: memref<512x512xf32, #tpu.memory_space<vmem>>, %arg3: memref<512x128xbf16, #tpu.memory_space<vmem>>, %arg4: memref<1x128xf32, #tpu.memory_space<vmem>>, %arg5: memref<128x128xbf16, #tpu.memory_space<vmem>>, %arg6: memref<512x128xbf16, #tpu.memory_space<vmem>>, %arg7: memref<512x128xf32, #tpu.memory_space<vmem>>) attributes {dimension_semantics = [#tpu.dimension_semantics<parallel>, #tpu.dimension_semantics<arbitrary>], iteration_bounds = array<i64: 1, 1>, scalar_prefetch = 0 : i64, scratch_operands = 1 : i64, tpu.core_type = #tpu.core_type<tc>, window_params = [{transform_indices = @transform_0, window_bounds = array<i64: 512, 512>}, {pipeline_mode = #tpu.pipeline_mode<synchronous>, transform_indices = @transform_1, window_bounds = array<i64: 512, 128>}, {pipeline_mode = #tpu.pipeline_mode<synchronous>, transform_indices = @transform_2, window_bounds = array<i64: 1, 128>}, {pipeline_mode = #tpu.pipeline_mode<synchronous>, transform_indices = @transform_3, window_bounds = array<i64: 128, 128>}, {transform_indices = @transform_4, window_bounds = array<i64: 512, 128>}]} {
    %c0_i32 = arith.constant 0 : i32
    %0 = arith.cmpi eq, %arg1, %c0_i32 : i32
    %1 = arith.extui %0 : i1 to i32
    %c0_i32_0 = arith.constant 0 : i32
    %2 = arith.cmpi ne, %1, %c0_i32_0 : i32
    scf.if %2 {
      %cst_11 = arith.constant 0.000000e+00 : f32
      %23 = vector.broadcast %cst_11 : f32 to vector<512x128xf32>
      %c0_12 = arith.constant 0 : index
      %c0_13 = arith.constant 0 : index
      %24 = vector.load %arg7[%c0_12, %c0_13] : memref<512x128xf32, #tpu.memory_space<vmem>>, vector<512x128xf32>
      tpu.vector_store %arg7[%c0_12, %c0_13], %23 {strides = array<i32>} : memref<512x128xf32, #tpu.memory_space<vmem>>, vector<512x128xf32>,
    } else {
    }
    %c0 = arith.constant 0 : index
    %c0_1 = arith.constant 0 : index
    %3 = vector.load %arg2[%c0, %c0_1] : memref<512x512xf32, #tpu.memory_space<vmem>>, vector<512x512xf32>
    %4 = tpu.iota {dimensions = array<i32: 1>} : vector<512x512xi32>
    %c512_i32 = arith.constant 512 : i32
    %5 = arith.muli %arg1, %c512_i32 : i32
    %c300_i32 = arith.constant 300 : i32
    %6 = arith.subi %c300_i32, %5 : i32
    %7 = vector.broadcast %6 : i32 to vector<512x512xi32>
    %8 = arith.cmpi slt, %4, %7 : vector<512x512xi32>
    %cst = arith.constant 0.000000e+00 : f32
    %9 = vector.broadcast %cst : f32 to vector<512x512xf32>
    %10 = arith.select %8, %3, %9 : vector<512x512xi1>, vector<512x512xf32>
    %c512_i32_2 = arith.constant 512 : i32
    %11 = arith.muli %arg1, %c512_i32_2 : i32
    %12 = tpu.assume_multiple %11, 512 : i32
    %c0_3 = arith.constant 0 : index
    %c0_4 = arith.constant 0 : index
    %13 = vector.load %arg7[%c0_3, %c0_4] : memref<512x128xf32, #tpu.memory_space<vmem>>, vector<512x128xf32>
    %14 = arith.truncf %10 : vector<512x512xf32> to vector<512x512xbf16>
    %15 = arith.index_cast %12 : i32 to index
    %c0_5 = arith.constant 0 : index
    %16 = vector.load %arg3[%15, %c0_5] : memref<512x128xbf16, #tpu.memory_space<vmem>>, vector<512x128xbf16>
    %cst_6 = arith.constant dense<0.000000e+00> : vector<512x128xf32>
    %17 = tpu.matmul %14, %16, %cst_6 {dimension_numbers = #tpu.dot_dimension_numbers<[1], [0], [0], [1], [0, 0, 1, 1], [], []>} : vector<512x512xbf16>, vector<512x128xbf16>, vector<512x128xf32> -> vector<512x128xf32>
    %18 = arith.addf %13, %17 : vector<512x128xf32>
    %c0_7 = arith.constant 0 : index
    %c0_8 = arith.constant 0 : index
    %19 = vector.load %arg7[%c0_7, %c0_8] : memref<512x128xf32, #tpu.memory_space<vmem>>, vector<512x128xf32>
    tpu.vector_store %arg7[%c0_7, %c0_8], %18 {strides = array<i32>} : memref<512x128xf32, #tpu.memory_space<vmem>>, vector<512x128xf32>,
    %c0_i32_9 = arith.constant 0 : i32
    %20 = arith.cmpi eq, %arg1, %c0_i32_9 : i32
    %21 = arith.extui %20 : i1 to i32
    %c0_i32_10 = arith.constant 0 : i32
    %22 = arith.cmpi ne, %21, %c0_i32_10 : i32
    scf.if %22 {
      %c0_11 = arith.constant 0 : index
      %c0_12 = arith.constant 0 : index
      %23 = vector.load %arg7[%c0_11, %c0_12] : memref<512x128xf32, #tpu.memory_space<vmem>>, vector<512x128xf32>
      %c0_13 = arith.constant 0 : index
      %c0_14 = arith.constant 0 : index
      %24 = vector.load %arg4[%c0_13, %c0_14] : memref<1x128xf32, #tpu.memory_space<vmem>>, vector<1x128xf32>
      %25 = vector.broadcast %24 : vector<1x128xf32> to vector<512x128xf32>
      %26 = arith.addf %23, %25 : vector<512x128xf32>
      %cst_15 = arith.constant 0.000000e+00 : f32
      %27 = vector.broadcast %cst_15 : f32 to vector<512x128xf32>
      %28 = arith.maximumf %26, %27 : vector<512x128xf32>
      %29 = arith.truncf %28 : vector<512x128xf32> to vector<512x128xbf16>
      %c0_16 = arith.constant 0 : index
      %c0_17 = arith.constant 0 : index
      %30 = vector.load %arg5[%c0_16, %c0_17] : memref<128x128xbf16, #tpu.memory_space<vmem>>, vector<128x128xbf16>
      %cst_18 = arith.constant dense<0.000000e+00> : vector<512x128xf32>
      %31 = tpu.matmul %29, %30, %cst_18 {dimension_numbers = #tpu.dot_dimension_numbers<[1], [0], [0], [1], [0, 0, 1, 1], [], []>} : vector<512x128xbf16>, vector<128x128xbf16>, vector<512x128xf32> -> vector<512x128xf32>
      %32 = arith.truncf %31 : vector<512x128xf32> to vector<512x128xbf16>
      %c0_19 = arith.constant 0 : index
      %c0_20 = arith.constant 0 : index
      %33 = vector.load %arg6[%c0_19, %c0_20] : memref<512x128xbf16, #tpu.memory_space<vmem>>, vector<512x128xbf16>
      tpu.vector_store %arg6[%c0_19, %c0_20], %32 {strides = array<i32>} : memref<512x128xbf16, #tpu.memory_space<vmem>>, vector<512x128xbf16>,
    } else {
    }
    return
  }
  func.func @transform_0(%arg0: i32, %arg1: i32) -> (i32, i32) {
    %c0_i32 = arith.constant 0 : i32
    return %arg0, %arg1 : i32, i32
  }
  func.func @transform_1(%arg0: i32, %arg1: i32) -> (i32, i32) {
    %c0_i32 = arith.constant 0 : i32
    %c0_i32_0 = arith.constant 0 : i32
    %c0_i32_1 = arith.constant 0 : i32
    return %c0_i32, %c0_i32_0 : i32, i32
  }
  func.func @transform_2(%arg0: i32, %arg1: i32) -> (i32, i32) {
    %c0_i32 = arith.constant 0 : i32
    %c0_i32_0 = arith.constant 0 : i32
    %c0_i32_1 = arith.constant 0 : i32
    return %c0_i32, %c0_i32_0 : i32, i32
  }
  func.func @transform_3(%arg0: i32, %arg1: i32) -> (i32, i32) {
    %c0_i32 = arith.constant 0 : i32
    %c0_i32_0 = arith.constant 0 : i32
    %c0_i32_1 = arith.constant 0 : i32
    return %c0_i32, %c0_i32_0 : i32, i32
  }
  func.func @transform_4(%arg0: i32, %arg1: i32) -> (i32, i32) {
    %c0_i32 = arith.constant 0 : i32
    %c0_i32_0 = arith.constant 0 : i32
    return %arg0, %c0_i32 : i32, i32
  }
}

</mosaic_0001>

<llo_original>
// kernel: tpu_custom_call.1
$region0: #{tpu_custom_call.1}
  #allocation0 [shape = 'u32[]', space=smem, size = 0x4, offset = 0x4, fixed_abs, tag = 'smem constant byte address 0x4 - core index']
  #allocation1 [shape = 'u32[144,128]{1,0:T(1,128)}', space=vmem, size = 0x12000, scoped, tag = 'internal scratch']
  #allocation2 [shape = 'f32[512,128]{1,0:T(8,128)}', space=vmem, size = 0x40000, scoped, tag = 'scratch operand']
  %s0 = inlined_call_operand.hbm [shape: f32[300,300], index: 0, kind: input, shape index: {}]
  %s1 = inlined_call_operand.hbm [shape: bf16[512,128], index: 1, kind: input, shape index: {}]
  %s2 = inlined_call_operand.vmem [shape: f32[1,128], index: 2, kind: input, shape index: {}]
  %s3 = inlined_call_operand.hbm [shape: bf16[128,128], index: 3, kind: input, shape index: {}]
  %s4 = inlined_call_operand.hbm [shape: bf16[300,128], index: 4, kind: output, shape index: {}]
  %s5 = sld [smem:[#allocation0]]
  $region46: #{tpu_custom_call.1} parent=0
    _
  %s7 = ssub.s32 1, %s5
  %s8 = scalar_select 0, %s7, %s5
  $region1: #{tpu_custom_call.1} parent=0
    #allocation3 [shape = 'u8[1048576]{0}', space=vmem, size = 0x100000, scoped, tag = 'input window, operand 0, single buffered']
    #allocation4 [shape = 's32[1]{0}', space=sflag, size = 0x4, scoped, tag = 'scoped memory for tpu_custom_call.1']
    #allocation5 [shape = 's32[1]{0}', space=sflag, size = 0x4, scoped, tag = 'scoped memory for tpu_custom_call.1']
    #allocation6 [shape = 'u8[131072]{0}', space=vmem, size = 0x20000, scoped, tag = 'input window, operand 1, single buffered']
    #allocation7 [shape = 's32[1]{0}', space=sflag, size = 0x4, scoped, tag = 'scoped memory for tpu_custom_call.1']
    #allocation8 [shape = 'u8[32768]{0}', space=vmem, size = 0x8000, scoped, tag = 'input window, operand 3, single buffered']
    #allocation9 [shape = 'u8[131072]{0}', space=vmem, size = 0x20000, scoped, tag = 'output window, operand 0, single buffered']
    %9 = vsyncpa [#allocation4], 0
    %10 = vsyncpa [#allocation7], 0
    %11 = vsyncpa [#allocation5], 0
    // Predicated region
    $region2: #{tpu_custom_call.1} parent=1 // pred_check
      _
    $region3: #{tpu_custom_call.1} parent=1 // pred_check_branch
      %13 = sbr.rel (0) target = $region5
    $region4: #{tpu_custom_call.1} parent=1 // pred_region
      %s15 = ssub.s32 32768, 14592
      %16 = vsyncadd [#allocation4], %s15
      %s17 = sshll.u32 [#allocation3], 4
      %s18 = int_to_ptr.vmem [resolvable:$true] %s17
      %23 = dma.hbm_to_vmem [thread:$0]  %s0, 14592, %s18, [#allocation4], 384, 512, 24
    $region5: #{tpu_custom_call.1} parent=1 // pred_fallthru
      _
    // Predicated region
    $region6: #{tpu_custom_call.1} parent=1 // pred_check
      _
    $region7: #{tpu_custom_call.1} parent=1 // pred_check_branch
      %25 = sbr.rel (0) target = $region9
    $region8: #{tpu_custom_call.1} parent=1 // pred_region
      %s27 = ssub.s32 4096, 4096
      %28 = vsyncadd [#allocation7], %s27
      %s29 = sshll.u32 [#allocation6], 4
      %s30 = int_to_ptr.vmem [resolvable:$true] %s29
      %35 = dma.hbm_to_vmem [thread:$0]  %s1, 4096, %s30, [#allocation7], 64, 64, 4
    $region9: #{tpu_custom_call.1} parent=1 // pred_fallthru
      _
    // Predicated region
    $region10: #{tpu_custom_call.1} parent=1 // pred_check
      _
    $region11: #{tpu_custom_call.1} parent=1 // pred_check_branch
      %37 = sbr.rel (0) target = $region13
    $region12: #{tpu_custom_call.1} parent=1 // pred_region
      _
    $region13: #{tpu_custom_call.1} parent=1 // pred_fallthru
      _
    // Predicated region
    $region14: #{tpu_custom_call.1} parent=1 // pred_check
      _
    $region15: #{tpu_custom_call.1} parent=1 // pred_check_branch
      %39 = sbr.rel (0) target = $region17
    $region16: #{tpu_custom_call.1} parent=1 // pred_region
      %s41 = ssub.s32 1024, 1024
      %42 = vsyncadd [#allocation7], %s41
      %s43 = sshll.u32 [#allocation8], 4
      %s44 = int_to_ptr.vmem [resolvable:$true] %s43
      %49 = dma.hbm_to_vmem [thread:$0]  %s3, 1024, %s44, [#allocation7], 64, 64, 4
    $region17: #{tpu_custom_call.1} parent=1 // pred_fallthru
      _
    // Predicated region
    $region18: #{tpu_custom_call.1} parent=1 // pred_check
      _
    $region19: #{tpu_custom_call.1} parent=1 // pred_check_branch
      %51 = sbr.rel (0) target = $region21
    $region20: #{tpu_custom_call.1} parent=1 // pred_region
      %52 = dma.done [#allocation4], 32768
    $region21: #{tpu_custom_call.1} parent=1 // pred_fallthru
      _
    // Predicated region
    $region22: #{tpu_custom_call.1} parent=1 // pred_check
      _
    $region23: #{tpu_custom_call.1} parent=1 // pred_check_branch
      %54 = sbr.rel (0) target = $region25
    $region24: #{tpu_custom_call.1} parent=1 // pred_region
      %55 = dma.done [#allocation7], 4096
    $region25: #{tpu_custom_call.1} parent=1 // pred_fallthru
      _
    // Predicated region
    $region26: #{tpu_custom_call.1} parent=1 // pred_check
      _
    $region27: #{tpu_custom_call.1} parent=1 // pred_check_branch
      %57 = sbr.rel (0) target = $region29
    $region28: #{tpu_custom_call.1} parent=1 // pred_region
      %58 = dma.done [#allocation7], 1024
    $region29: #{tpu_custom_call.1} parent=1 // pred_fallthru
      _
    %p60 = scmp.eq.s32.totalorder 0, 0
    // Predicated region
    $region30: #{tpu_custom_call.1} parent=1 // pred_check
      %p61 = pneg %p60
    $region31: #{tpu_custom_call.1} parent=1 // pred_check_branch
      %63 = sbr.rel (%p61) target = $region33
    $region32: #{tpu_custom_call.1} parent=1 // pred_region
      %64 = vst [vmem:[#allocation2] sm:$0xff] 0.0
      %65 = vst [vmem:[#allocation2 + $0x8] sm:$0xff] 0.0
      %66 = vst [vmem:[#allocation2 + $0x10] sm:$0xff] 0.0
      %67 = vst [vmem:[#allocation2 + $0x18] sm:$0xff] 0.0
      %68 = vst [vmem:[#allocation2 + $0x20] sm:$0xff] 0.0
      %69 = vst [vmem:[#allocation2 + $0x28] sm:$0xff] 0.0
      %70 = vst [vmem:[#allocation2 + $0x30] sm:$0xff] 0.0
      %71 = vst [vmem:[#allocation2 + $0x38] sm:$0xff] 0.0
      %72 = vst [vmem:[#allocation2 + $0x40] sm:$0xff] 0.0
      %73 = vst [vmem:[#allocation2 + $0x48] sm:$0xff] 0.0
      %74 = vst [vmem:[#allocation2 + $0x50] sm:$0xff] 0.0
      %75 = vst [vmem:[#allocation2 + $0x58] sm:$0xff] 0.0
      %76 = vst [vmem:[#allocation2 + $0x60] sm:$0xff] 0.0
      %77 = vst [vmem:[#allocation2 + $0x68] sm:$0xff] 0.0
      %78 = vst [vmem:[#allocation2 + $0x70] sm:$0xff] 0.0
      %79 = vst [vmem:[#allocation2 + $0x78] sm:$0xff] 0.0
      %80 = vst [vmem:[#allocation2 + $0x80] sm:$0xff] 0.0
      %81 = vst [vmem:[#allocation2 + $0x88] sm:$0xff] 0.0
      %82 = vst [vmem:[#allocation2 + $0x90] sm:$0xff] 0.0
      %83 = vst [vmem:[#allocation2 + $0x98] sm:$0xff] 0.0
      %84 = vst [vmem:[#allocation2 + $0xa0] sm:$0xff] 0.0
      %85 = vst [vmem:[#allocation2 + $0xa8] sm:$0xff] 0.0
      %86 = vst [vmem:[#allocation2 + $0xb0] sm:$0xff] 0.0
      %87 = vst [vmem:[#allocation2 + $0xb8] sm:$0xff] 0.0
      %88 = vst [vmem:[#allocation2 + $0xc0] sm:$0xff] 0.0
      %89 = vst [vmem:[#allocation2 + $0xc8] sm:$0xff] 0.0
      %90 = vst [vmem:[#allocation2 + $0xd0] sm:$0xff] 0.0
      %91 = vst [vmem:[#allocation2 + $0xd8] sm:$0xff] 0.0
      %92 = vst [vmem:[#allocation2 + $0xe0] sm:$0xff] 0.0
      %93 = vst [vmem:[#allocation2 + $0xe8] sm:$0xff] 0.0
      %94 = vst [vmem:[#allocation2 + $0xf0] sm:$0xff] 0.0
      %95 = vst [vmem:[#allocation2 + $0xf8] sm:$0xff] 0.0
      %96 = vst [vmem:[#allocation2 + $0x100] sm:$0xff] 0.0
      %97 = vst [vmem:[#allocation2 + $0x108] sm:$0xff] 0.0
      %98 = vst [vmem:[#allocation2 + $0x110] sm:$0xff] 0.0
      %99 = vst [vmem:[#allocation2 + $0x118] sm:$0xff] 0.0
      %100 = vst [vmem:[#allocation2 + $0x120] sm:$0xff] 0.0
      %101 = vst [vmem:[#allocation2 + $0x128] sm:$0xff] 0.0
      %102 = vst [vmem:[#allocation2 + $0x130] sm:$0xff] 0.0
      %103 = vst [vmem:[#allocation2 + $0x138] sm:$0xff] 0.0
      %104 = vst [vmem:[#allocation2 + $0x140] sm:$0xff] 0.0
      %105 = vst [vmem:[#allocation2 + $0x148] sm:$0xff] 0.0
      %106 = vst [vmem:[#allocation2 + $0x150] sm:$0xff] 0.0
      %107 = vst [vmem:[#allocation2 + $0x158] sm:$0xff] 0.0
      %108 = vst [vmem:[#allocation2 + $0x160] sm:$0xff] 0.0
      %109 = vst [vmem:[#allocation2 + $0x168] sm:$0xff] 0.0
      %110 = vst [vmem:[#allocation2 + $0x170] sm:$0xff] 0.0
      %111 = vst [vmem:[#allocation2 + $0x178] sm:$0xff] 0.0
      %112 = vst [vmem:[#allocation2 + $0x180] sm:$0xff] 0.0
      %113 = vst [vmem:[#allocation2 + $0x188] sm:$0xff] 0.0
      %114 = vst [vmem:[#allocation2 + $0x190] sm:$0xff] 0.0
      %115 = vst [vmem:[#allocation2 + $0x198] sm:$0xff] 0.0
      %116 = vst [vmem:[#allocation2 + $0x1a0] sm:$0xff] 0.0
      %117 = vst [vmem:[#allocation2 + $0x1a8] sm:$0xff] 0.0
      %118 = vst [vmem:[#allocation2 + $0x1b0] sm:$0xff] 0.0
      %119 = vst [vmem:[#allocation2 + $0x1b8] sm:$0xff] 0.0
      %120 = vst [vmem:[#allocation2 + $0x1c0] sm:$0xff] 0.0
      %121 = vst [vmem:[#allocation2 + $0x1c8] sm:$0xff] 0.0
      %122 = vst [vmem:[#allocation2 + $0x1d0] sm:$0xff] 0.0
      %123 = vst [vmem:[#allocation2 + $0x1d8] sm:$0xff] 0.0
      %124 = vst [vmem:[#allocation2 + $0x1e0] sm:$0xff] 0.0
      %125 = vst [vmem:[#allocation2 + $0x1e8] sm:$0xff] 0.0
      %126 = vst [vmem:[#allocation2 + $0x1f0] sm:$0xff] 0.0
      %127 = vst [vmem:[#allocation2 + $0x1f8] sm:$0xff] 0.0
    $region33: #{tpu_custom_call.1} parent=1 // pred_fallthru
      _
    %v128 = vld [vmem:[#allocation3] sm:$0xff]
    %v129 = vld [vmem:[#allocation3 + $0x8] sm:$0xff]
    %v130 = vld [vmem:[#allocation3 + $0x10] sm:$0xff]
    %v131 = vld [vmem:[#allocation3 + $0x18] sm:$0xff]
    %v132 = vld [vmem:[#allocation3 + $0x20] sm:$0xff]
    %v133 = vld [vmem:[#allocation3 + $0x28] sm:$0xff]
    %v134 = vld [vmem:[#allocation3 + $0x30] sm:$0xff]
    %v135 = vld [vmem:[#allocation3 + $0x38] sm:$0xff]
    %v136 = vld [vmem:[#allocation3 + $0x40] sm:$0xff]
    %v137 = vld [vmem:[#allocation3 + $0x48] sm:$0xff]
    %v138 = vld [vmem:[#allocation3 + $0x50] sm:$0xff]
    %v139 = vld [vmem:[#allocation3 + $0x58] sm:$0xff]
    %v140 = vld [vmem:[#allocation3 + $0x60] sm:$0xff]
    %v141 = vld [vmem:[#allocation3 + $0x68] sm:$0xff]
    %v142 = vld [vmem:[#allocation3 + $0x70] sm:$0xff]
    %v143 = vld [vmem:[#allocation3 + $0x78] sm:$0xff]
    %v144 = vld [vmem:[#allocation3 + $0x80] sm:$0xff]
    %v145 = vld [vmem:[#allocation3 + $0x88] sm:$0xff]
    %v146 = vld [vmem:[#allocation3 + $0x90] sm:$0xff]
    %v147 = vld [vmem:[#allocation3 + $0x98] sm:$0xff]
    %v148 = vld [vmem:[#allocation3 + $0xa0] sm:$0xff]
    %v149 = vld [vmem:[#allocation3 + $0xa8] sm:$0xff]
    %v150 = vld [vmem:[#allocation3 + $0xb0] sm:$0xff]
    %v151 = vld [vmem:[#allocation3 + $0xb8] sm:$0xff]
    %v152 = vld [vmem:[#allocation3 + $0xc0] sm:$0xff]
    %v153 = vld [vmem:[#allocation3 + $0xc8] sm:$0xff]
    %v154 = vld [vmem:[#allocation3 + $0xd0] sm:$0xff]
    %v155 = vld [vmem:[#allocation3 + $0xd8] sm:$0xff]
    %v156 = vld [vmem:[#allocation3 + $0xe0] sm:$0xff]
    %v157 = vld [vmem:[#allocation3 + $0xe8] sm:$0xff]
    %v158 = vld [vmem:[#allocation3 + $0xf0] sm:$0xff]
    %v159 = vld [vmem:[#allocation3 + $0xf8] sm:$0xff]
    %v160 = vld [vmem:[#allocation3 + $0x100] sm:$0xff]
    %v161 = vld [vmem:[#allocation3 + $0x108] sm:$0xff]
    %v162 = vld [vmem:[#allocation3 + $0x110] sm:$0xff]
    %v163 = vld [vmem:[#allocation3 + $0x118] sm:$0xff]
    %v164 = vld [vmem:[#allocation3 + $0x120] sm:$0xff]
    %v165 = vld [vmem:[#allocation3 + $0x128] sm:$0xff]
    %v166 = vld [vmem:[#allocation3 + $0x130] sm:$0xff]
    %v167 = vld [vmem:[#allocation3 + $0x138] sm:$0xff]
    %v168 = vld [vmem:[#allocation3 + $0x140] sm:$0xff]
    %v169 = vld [vmem:[#allocation3 + $0x148] sm:$0xff]
    %v170 = vld [vmem:[#allocation3 + $0x150] sm:$0xff]
    %v171 = vld [vmem:[#allocation3 + $0x158] sm:$0xff]
    %v172 = vld [vmem:[#allocation3 + $0x160] sm:$0xff]
    %v173 = vld [vmem:[#allocation3 + $0x168] sm:$0xff]
    %v174 = vld [vmem:[#allocation3 + $0x170] sm:$0xff]
    %v175 = vld [vmem:[#allocation3 + $0x178] sm:$0xff]
    %v176 = vld [vmem:[#allocation3 + $0x180] sm:$0xff]
    %v177 = vld [vmem:[#allocation3 + $0x188] sm:$0xff]
    %v178 = vld [vmem:[#allocation3 + $0x190] sm:$0xff]
    %v179 = vld [vmem:[#allocation3 + $0x198] sm:$0xff]
    %v180 = vld [vmem:[#allocation3 + $0x1a0] sm:$0xff]
    %v181 = vld [vmem:[#allocation3 + $0x1a8] sm:$0xff]
    %v182 = vld [vmem:[#allocation3 + $0x1b0] sm:$0xff]
    %v183 = vld [vmem:[#allocation3 + $0x1b8] sm:$0xff]
    %v184 = vld [vmem:[#allocation3 + $0x1c0] sm:$0xff]
    %v185 = vld [vmem:[#allocation3 + $0x1c8] sm:$0xff]
    %v186 = vld [vmem:[#allocation3 + $0x1d0] sm:$0xff]
    %v187 = vld [vmem:[#allocation3 + $0x1d8] sm:$0xff]
    %v188 = vld [vmem:[#allocation3 + $0x1e0] sm:$0xff]
    %v189 = vld [vmem:[#allocation3 + $0x1e8] sm:$0xff]
    %v190 = vld [vmem:[#allocation3 + $0x1f0] sm:$0xff]
    %v191 = vld [vmem:[#allocation3 + $0x1f8] sm:$0xff]
    %v192 = vld [vmem:[#allocation3 + $0x200] sm:$0xff]
    %v193 = vld [vmem:[#allocation3 + $0x208] sm:$0xff]
    %v194 = vld [vmem:[#allocation3 + $0x210] sm:$0xff]
    %v195 = vld [vmem:[#allocation3 + $0x218] sm:$0xff]
    %v196 = vld [vmem:[#allocation3 + $0x220] sm:$0xff]
    %v197 = vld [vmem:[#allocation3 + $0x228] sm:$0xff]
    %v198 = vld [vmem:[#allocation3 + $0x230] sm:$0xff]
    %v199 = vld [vmem:[#allocation3 + $0x238] sm:$0xff]
    %v200 = vld [vmem:[#allocation3 + $0x240] sm:$0xff]
    %v201 = vld [vmem:[#allocation3 + $0x248] sm:$0xff]
    %v202 = vld [vmem:[#allocation3 + $0x250] sm:$0xff]
    %v203 = vld [vmem:[#allocation3 + $0x258] sm:$0xff]
    %v204 = vld [vmem:[#allocation3 + $0x260] sm:$0xff]
    %v205 = vld [vmem:[#allocation3 + $0x268] sm:$0xff]
    %v206 = vld [vmem:[#allocation3 + $0x270] sm:$0xff]
    %v207 = vld [vmem:[#allocation3 + $0x278] sm:$0xff]
    %v208 = vld [vmem:[#allocation3 + $0x280] sm:$0xff]
    %v209 = vld [vmem:[#allocation3 + $0x288] sm:$0xff]
    %v210 = vld [vmem:[#allocation3 + $0x290] sm:$0xff]
    %v211 = vld [vmem:[#allocation3 + $0x298] sm:$0xff]
    %v212 = vld [vmem:[#allocation3 + $0x2a0] sm:$0xff]
    %v213 = vld [vmem:[#allocation3 + $0x2a8] sm:$0xff]
    %v214 = vld [vmem:[#allocation3 + $0x2b0] sm:$0xff]
    %v215 = vld [vmem:[#allocation3 + $0x2b8] sm:$0xff]
    %v216 = vld [vmem:[#allocation3 + $0x2c0] sm:$0xff]
    %v217 = vld [vmem:[#allocation3 + $0x2c8] sm:$0xff]
    %v218 = vld [vmem:[#allocation3 + $0x2d0] sm:$0xff]
    %v219 = vld [vmem:[#allocation3 + $0x2d8] sm:$0xff]
    %v220 = vld [vmem:[#allocation3 + $0x2e0] sm:$0xff]
    %v221 = vld [vmem:[#allocation3 + $0x2e8] sm:$0xff]
    %v222 = vld [vmem:[#allocation3 + $0x2f0] sm:$0xff]
    %v223 = vld [vmem:[#allocation3 + $0x2f8] sm:$0xff]
    %v224 = vld [vmem:[#allocation3 + $0x300] sm:$0xff]
    %v225 = vld [vmem:[#allocation3 + $0x308] sm:$0xff]
    %v226 = vld [vmem:[#allocation3 + $0x310] sm:$0xff]
    %v227 = vld [vmem:[#allocation3 + $0x318] sm:$0xff]
    %v228 = vld [vmem:[#allocation3 + $0x320] sm:$0xff]
    %v229 = vld [vmem:[#allocation3 + $0x328] sm:$0xff]
    %v230 = vld [vmem:[#allocation3 + $0x330] sm:$0xff]
    %v231 = vld [vmem:[#allocation3 + $0x338] sm:$0xff]
    %v232 = vld [vmem:[#allocation3 + $0x340] sm:$0xff]
    %v233 = vld [vmem:[#allocation3 + $0x348] sm:$0xff]
    %v234 = vld [vmem:[#allocation3 + $0x350] sm:$0xff]
    %v235 = vld [vmem:[#allocation3 + $0x358] sm:$0xff]
    %v236 = vld [vmem:[#allocation3 + $0x360] sm:$0xff]
    %v237 = vld [vmem:[#allocation3 + $0x368] sm:$0xff]
    %v238 = vld [vmem:[#allocation3 + $0x370] sm:$0xff]
    %v239 = vld [vmem:[#allocation3 + $0x378] sm:$0xff]
    %v240 = vld [vmem:[#allocation3 + $0x380] sm:$0xff]
    %v241 = vld [vmem:[#allocation3 + $0x388] sm:$0xff]
    %v242 = vld [vmem:[#allocation3 + $0x390] sm:$0xff]
    %v243 = vld [vmem:[#allocation3 + $0x398] sm:$0xff]
    %v244 = vld [vmem:[#allocation3 + $0x3a0] sm:$0xff]
    %v245 = vld [vmem:[#allocation3 + $0x3a8] sm:$0xff]
    %v246 = vld [vmem:[#allocation3 + $0x3b0] sm:$0xff]
    %v247 = vld [vmem:[#allocation3 + $0x3b8] sm:$0xff]
    %v248 = vld [vmem:[#allocation3 + $0x3c0] sm:$0xff]
    %v249 = vld [vmem:[#allocation3 + $0x3c8] sm:$0xff]
    %v250 = vld [vmem:[#allocation3 + $0x3d0] sm:$0xff]
    %v251 = vld [vmem:[#allocation3 + $0x3d8] sm:$0xff]
    %v252 = vld [vmem:[#allocation3 + $0x3e0] sm:$0xff]
    %v253 = vld [vmem:[#allocation3 + $0x3e8] sm:$0xff]
    %v254 = vld [vmem:[#allocation3 + $0x3f0] sm:$0xff]
    %v255 = vld [vmem:[#allocation3 + $0x3f8] sm:$0xff]
    %v256 = vld [vmem:[#allocation3 + $0x400] sm:$0xff]
    %v257 = vld [vmem:[#allocation3 + $0x408] sm:$0xff]
    %v258 = vld [vmem:[#allocation3 + $0x410] sm:$0xff]
    %v259 = vld [vmem:[#allocation3 + $0x418] sm:$0xff]
    %v260 = vld [vmem:[#allocation3 + $0x420] sm:$0xff]
    %v261 = vld [vmem:[#allocation3 + $0x428] sm:$0xff]
    %v262 = vld [vmem:[#allocation3 + $0x430] sm:$0xff]
    %v263 = vld [vmem:[#allocation3 + $0x438] sm:$0xff]
    %v264 = vld [vmem:[#allocation3 + $0x440] sm:$0xff]
    %v265 = vld [vmem:[#allocation3 + $0x448] sm:$0xff]
    %v266 = vld [vmem:[#allocation3 + $0x450] sm:$0xff]
    %v267 = vld [vmem:[#allocation3 + $0x458] sm:$0xff]
    %v268 = vld [vmem:[#allocation3 + $0x460] sm:$0xff]
    %v269 = vld [vmem:[#allocation3 + $0x468] sm:$0xff]
    %v270 = vld [vmem:[#allocation3 + $0x470] sm:$0xff]
    %v271 = vld [vmem:[#allocation3 + $0x478] sm:$0xff]
    %v272 = vld [vmem:[#allocation3 + $0x480] sm:$0xff]
    %v273 = vld [vmem:[#allocation3 + $0x488] sm:$0xff]
    %v274 = vld [vmem:[#allocation3 + $0x490] sm:$0xff]
    %v275 = vld [vmem:[#allocation3 + $0x498] sm:$0xff]
    %v276 = vld [vmem:[#allocation3 + $0x4a0] sm:$0xff]
    %v277 = vld [vmem:[#allocation3 + $0x4a8] sm:$0xff]
    %v278 = vld [vmem:[#allocation3 + $0x4b0] sm:$0xff]
    %v279 = vld [vmem:[#allocation3 + $0x4b8] sm:$0xff]
    %v280 = vld [vmem:[#allocation3 + $0x4c0] sm:$0xff]
    %v281 = vld [vmem:[#allocation3 + $0x4c8] sm:$0xff]
    %v282 = vld [vmem:[#allocation3 + $0x4d0] sm:$0xff]
    %v283 = vld [vmem:[#allocation3 + $0x4d8] sm:$0xff]
    %v284 = vld [vmem:[#allocation3 + $0x4e0] sm:$0xff]
    %v285 = vld [vmem:[#allocation3 + $0x4e8] sm:$0xff]
    %v286 = vld [vmem:[#allocation3 + $0x4f0] sm:$0xff]
    %v287 = vld [vmem:[#allocation3 + $0x4f8] sm:$0xff]
    %v288 = vld [vmem:[#allocation3 + $0x500] sm:$0xff]
    %v289 = vld [vmem:[#allocation3 + $0x508] sm:$0xff]
    %v290 = vld [vmem:[#allocation3 + $0x510] sm:$0xff]
    %v291 = vld [vmem:[#allocation3 + $0x518] sm:$0xff]
    %v292 = vld [vmem:[#allocation3 + $0x520] sm:$0xff]
    %v293 = vld [vmem:[#allocation3 + $0x528] sm:$0xff]
    %v294 = vld [vmem:[#allocation3 + $0x530] sm:$0xff]
    %v295 = vld [vmem:[#allocation3 + $0x538] sm:$0xff]
    %v296 = vld [vmem:[#allocation3 + $0x540] sm:$0xff]
    %v297 = vld [vmem:[#allocation3 + $0x548] sm:$0xff]
    %v298 = vld [vmem:[#allocation3 + $0x550] sm:$0xff]
    %v299 = vld [vmem:[#allocation3 + $0x558] sm:$0xff]
    %v300 = vld [vmem:[#allocation3 + $0x560] sm:$0xff]
    %v301 = vld [vmem:[#allocation3 + $0x568] sm:$0xff]
    %v302 = vld [vmem:[#allocation3 + $0x570] sm:$0xff]
    %v303 = vld [vmem:[#allocation3 + $0x578] sm:$0xff]
    %v304 = vld [vmem:[#allocation3 + $0x580] sm:$0xff]
    %v305 = vld [vmem:[#allocation3 + $0x588] sm:$0xff]
    %v306 = vld [vmem:[#allocation3 + $0x590] sm:$0xff]
    %v307 = vld [vmem:[#allocation3 + $0x598] sm:$0xff]
    %v308 = vld [vmem:[#allocation3 + $0x5a0] sm:$0xff]
    %v309 = vld [vmem:[#allocation3 + $0x5a8] sm:$0xff]
    %v310 = vld [vmem:[#allocation3 + $0x5b0] sm:$0xff]
    %v311 = vld [vmem:[#allocation3 + $0x5b8] sm:$0xff]
    %v312 = vld [vmem:[#allocation3 + $0x5c0] sm:$0xff]
    %v313 = vld [vmem:[#allocation3 + $0x5c8] sm:$0xff]
    %v314 = vld [vmem:[#allocation3 + $0x5d0] sm:$0xff]
    %v315 = vld [vmem:[#allocation3 + $0x5d8] sm:$0xff]
    %v316 = vld [vmem:[#allocation3 + $0x5e0] sm:$0xff]
    %v317 = vld [vmem:[#allocation3 + $0x5e8] sm:$0xff]
    %v318 = vld [vmem:[#allocation3 + $0x5f0] sm:$0xff]
    %v319 = vld [vmem:[#allocation3 + $0x5f8] sm:$0xff]
    %v320 = vld [vmem:[#allocation3 + $0x600] sm:$0xff]
    %v321 = vld [vmem:[#allocation3 + $0x608] sm:$0xff]
    %v322 = vld [vmem:[#allocation3 + $0x610] sm:$0xff]
    %v323 = vld [vmem:[#allocation3 + $0x618] sm:$0xff]
    %v324 = vld [vmem:[#allocation3 + $0x620] sm:$0xff]
    %v325 = vld [vmem:[#allocation3 + $0x628] sm:$0xff]
    %v326 = vld [vmem:[#allocation3 + $0x630] sm:$0xff]
    %v327 = vld [vmem:[#allocation3 + $0x638] sm:$0xff]
    %v328 = vld [vmem:[#allocation3 + $0x640] sm:$0xff]
    %v329 = vld [vmem:[#allocation3 + $0x648] sm:$0xff]
    %v330 = vld [vmem:[#allocation3 + $0x650] sm:$0xff]
    %v331 = vld [vmem:[#allocation3 + $0x658] sm:$0xff]
    %v332 = vld [vmem:[#allocation3 + $0x660] sm:$0xff]
    %v333 = vld [vmem:[#allocation3 + $0x668] sm:$0xff]
    %v334 = vld [vmem:[#allocation3 + $0x670] sm:$0xff]
    %v335 = vld [vmem:[#allocation3 + $0x678] sm:$0xff]
    %v336 = vld [vmem:[#allocation3 + $0x680] sm:$0xff]
    %v337 = vld [vmem:[#allocation3 + $0x688] sm:$0xff]
    %v338 = vld [vmem:[#allocation3 + $0x690] sm:$0xff]
    %v339 = vld [vmem:[#allocation3 + $0x698] sm:$0xff]
    %v340 = vld [vmem:[#allocation3 + $0x6a0] sm:$0xff]
    %v341 = vld [vmem:[#allocation3 + $0x6a8] sm:$0xff]
    %v342 = vld [vmem:[#allocation3 + $0x6b0] sm:$0xff]
    %v343 = vld [vmem:[#allocation3 + $0x6b8] sm:$0xff]
    %v344 = vld [vmem:[#allocation3 + $0x6c0] sm:$0xff]
    %v345 = vld [vmem:[#allocation3 + $0x6c8] sm:$0xff]
    %v346 = vld [vmem:[#allocation3 + $0x6d0] sm:$0xff]
    %v347 = vld [vmem:[#allocation3 + $0x6d8] sm:$0xff]
    %v348 = vld [vmem:[#allocation3 + $0x6e0] sm:$0xff]
    %v349 = vld [vmem:[#allocation3 + $0x6e8] sm:$0xff]
    %v350 = vld [vmem:[#allocation3 + $0x6f0] sm:$0xff]
    %v351 = vld [vmem:[#allocation3 + $0x6f8] sm:$0xff]
    %v352 = vld [vmem:[#allocation3 + $0x700] sm:$0xff]
    %v353 = vld [vmem:[#allocation3 + $0x708] sm:$0xff]
    %v354 = vld [vmem:[#allocation3 + $0x710] sm:$0xff]
    %v355 = vld [vmem:[#allocation3 + $0x718] sm:$0xff]
    %v356 = vld [vmem:[#allocation3 + $0x720] sm:$0xff]
    %v357 = vld [vmem:[#allocation3 + $0x728] sm:$0xff]
    %v358 = vld [vmem:[#allocation3 + $0x730] sm:$0xff]
    %v359 = vld [vmem:[#allocation3 + $0x738] sm:$0xff]
    %v360 = vld [vmem:[#allocation3 + $0x740] sm:$0xff]
    %v361 = vld [vmem:[#allocation3 + $0x748] sm:$0xff]
    %v362 = vld [vmem:[#allocation3 + $0x750] sm:$0xff]
    %v363 = vld [vmem:[#allocation3 + $0x758] sm:$0xff]
    %v364 = vld [vmem:[#allocation3 + $0x760] sm:$0xff]
    %v365 = vld [vmem:[#allocation3 + $0x768] sm:$0xff]
    %v366 = vld [vmem:[#allocation3 + $0x770] sm:$0xff]
    %v367 = vld [vmem:[#allocation3 + $0x778] sm:$0xff]
    %v368 = vld [vmem:[#allocation3 + $0x780] sm:$0xff]
    %v369 = vld [vmem:[#allocation3 + $0x788] sm:$0xff]
    %v370 = vld [vmem:[#allocation3 + $0x790] sm:$0xff]
    %v371 = vld [vmem:[#allocation3 + $0x798] sm:$0xff]
    %v372 = vld [vmem:[#allocation3 + $0x7a0] sm:$0xff]
    %v373 = vld [vmem:[#allocation3 + $0x7a8] sm:$0xff]
    %v374 = vld [vmem:[#allocation3 + $0x7b0] sm:$0xff]
    %v375 = vld [vmem:[#allocation3 + $0x7b8] sm:$0xff]
    %v376 = vld [vmem:[#allocation3 + $0x7c0] sm:$0xff]
    %v377 = vld [vmem:[#allocation3 + $0x7c8] sm:$0xff]
    %v378 = vld [vmem:[#allocation3 + $0x7d0] sm:$0xff]
    %v379 = vld [vmem:[#allocation3 + $0x7d8] sm:$0xff]
    %v380 = vld [vmem:[#allocation3 + $0x7e0] sm:$0xff]
    %v381 = vld [vmem:[#allocation3 + $0x7e8] sm:$0xff]
    %v382 = vld [vmem:[#allocation3 + $0x7f0] sm:$0xff]
    %v383 = vld [vmem:[#allocation3 + $0x7f8] sm:$0xff]
    %v384 = vlaneseq
    %v385 = vand.u32 %v384, 127
    %v386 = vadd.s32 %v385, 128
    %v387 = vadd.s32 %v385, 256
    %v388 = vadd.s32 %v385, 384
    %s389 = smul.u32 0, 512
    %s390 = ssub.s32 300, %s389
    %v391 = vstv %s390
    %vm392 = vcmp.lt.s32.totalorder %v385, %v391
    %vm393 = vcmp.lt.s32.totalorder %v386, %v391
    %vm394 = vcmp.lt.s32.totalorder %v387, %v391
    %vm395 = vcmp.lt.s32.totalorder %v388, %v391
    %v396 = vsel %vm392, %v128, 0.0
    %v397 = vsel %vm393, %v129, 0.0
    %v398 = vsel %vm394, %v130, 0.0
    %v399 = vsel %vm395, %v131, 0.0
    %v400 = vsel %vm392, %v132, 0.0
    %v401 = vsel %vm393, %v133, 0.0
    %v402 = vsel %vm394, %v134, 0.0
    %v403 = vsel %vm395, %v135, 0.0
    %v404 = vsel %vm392, %v136, 0.0
    %v405 = vsel %vm393, %v137, 0.0
    %v406 = vsel %vm394, %v138, 0.0
    %v407 = vsel %vm395, %v139, 0.0
    %v408 = vsel %vm392, %v140, 0.0
    %v409 = vsel %vm393, %v141, 0.0
    %v410 = vsel %vm394, %v142, 0.0
    %v411 = vsel %vm395, %v143, 0.0
    %v412 = vsel %vm392, %v144, 0.0
    %v413 = vsel %vm393, %v145, 0.0
    %v414 = vsel %vm394, %v146, 0.0
    %v415 = vsel %vm395, %v147, 0.0
    %v416 = vsel %vm392, %v148, 0.0
    %v417 = vsel %vm393, %v149, 0.0
    %v418 = vsel %vm394, %v150, 0.0
    %v419 = vsel %vm395, %v151, 0.0
    %v420 = vsel %vm392, %v152, 0.0
    %v421 = vsel %vm393, %v153, 0.0
    %v422 = vsel %vm394, %v154, 0.0
    %v423 = vsel %vm395, %v155, 0.0
    %v424 = vsel %vm392, %v156, 0.0
    %v425 = vsel %vm393, %v157, 0.0
    %v426 = vsel %vm394, %v158, 0.0
    %v427 = vsel %vm395, %v159, 0.0
    %v428 = vsel %vm392, %v160, 0.0
    %v429 = vsel %vm393, %v161, 0.0
    %v430 = vsel %vm394, %v162, 0.0
    %v431 = vsel %vm395, %v163, 0.0
    %v432 = vsel %vm392, %v164, 0.0
    %v433 = vsel %vm393, %v165, 0.0
    %v434 = vsel %vm394, %v166, 0.0
    %v435 = vsel %vm395, %v167, 0.0
    %v436 = vsel %vm392, %v168, 0.0
    %v437 = vsel %vm393, %v169, 0.0
    %v438 = vsel %vm394, %v170, 0.0
    %v439 = vsel %vm395, %v171, 0.0
    %v440 = vsel %vm392, %v172, 0.0
    %v441 = vsel %vm393, %v173, 0.0
    %v442 = vsel %vm394, %v174, 0.0
    %v443 = vsel %vm395, %v175, 0.0
    %v444 = vsel %vm392, %v176, 0.0
    %v445 = vsel %vm393, %v177, 0.0
    %v446 = vsel %vm394, %v178, 0.0
    %v447 = vsel %vm395, %v179, 0.0
    %v448 = vsel %vm392, %v180, 0.0
    %v449 = vsel %vm393, %v181, 0.0
    %v450 = vsel %vm394, %v182, 0.0
    %v451 = vsel %vm395, %v183, 0.0
    %v452 = vsel %vm392, %v184, 0.0
    %v453 = vsel %vm393, %v185, 0.0
    %v454 = vsel %vm394, %v186, 0.0
    %v455 = vsel %vm395, %v187, 0.0
    %v456 = vsel %vm392, %v188, 0.0
    %v457 = vsel %vm393, %v189, 0.0
    %v458 = vsel %vm394, %v190, 0.0
    %v459 = vsel %vm395, %v191, 0.0
    %v460 = vsel %vm392, %v192, 0.0
    %v461 = vsel %vm393, %v193, 0.0
    %v462 = vsel %vm394, %v194, 0.0
    %v463 = vsel %vm395, %v195, 0.0
    %v464 = vsel %vm392, %v196, 0.0
    %v465 = vsel %vm393, %v197, 0.0
    %v466 = vsel %vm394, %v198, 0.0
    %v467 = vsel %vm395, %v199, 0.0
    %v468 = vsel %vm392, %v200, 0.0
    %v469 = vsel %vm393, %v201, 0.0
    %v470 = vsel %vm394, %v202, 0.0
    %v471 = vsel %vm395, %v203, 0.0
    %v472 = vsel %vm392, %v204, 0.0
    %v473 = vsel %vm393, %v205, 0.0
    %v474 = vsel %vm394, %v206, 0.0
    %v475 = vsel %vm395, %v207, 0.0
    %v476 = vsel %vm392, %v208, 0.0
    %v477 = vsel %vm393, %v209, 0.0
    %v478 = vsel %vm394, %v210, 0.0
    %v479 = vsel %vm395, %v211, 0.0
    %v480 = vsel %vm392, %v212, 0.0
    %v481 = vsel %vm393, %v213, 0.0
    %v482 = vsel %vm394, %v214, 0.0
    %v483 = vsel %vm395, %v215, 0.0
    %v484 = vsel %vm392, %v216, 0.0
    %v485 = vsel %vm393, %v217, 0.0
    %v486 = vsel %vm394, %v218, 0.0
    %v487 = vsel %vm395, %v219, 0.0
    %v488 = vsel %vm392, %v220, 0.0
    %v489 = vsel %vm393, %v221, 0.0
    %v490 = vsel %vm394, %v222, 0.0
    %v491 = vsel %vm395, %v223, 0.0
    %v492 = vsel %vm392, %v224, 0.0
    %v493 = vsel %vm393, %v225, 0.0
    %v494 = vsel %vm394, %v226, 0.0
    %v495 = vsel %vm395, %v227, 0.0
    %v496 = vsel %vm392, %v228, 0.0
    %v497 = vsel %vm393, %v229, 0.0
    %v498 = vsel %vm394, %v230, 0.0
    %v499 = vsel %vm395, %v231, 0.0
    %v500 = vsel %vm392, %v232, 0.0
    %v501 = vsel %vm393, %v233, 0.0
    %v502 = vsel %vm394, %v234, 0.0
    %v503 = vsel %vm395, %v235, 0.0
    %v504 = vsel %vm392, %v236, 0.0
    %v505 = vsel %vm393, %v237, 0.0
    %v506 = vsel %vm394, %v238, 0.0
    %v507 = vsel %vm395, %v239, 0.0
    %v508 = vsel %vm392, %v240, 0.0
    %v509 = vsel %vm393, %v241, 0.0
    %v510 = vsel %vm394, %v242, 0.0
    %v511 = vsel %vm395, %v243, 0.0
    %v512 = vsel %vm392, %v244, 0.0
    %v513 = vsel %vm393, %v245, 0.0
    %v514 = vsel %vm394, %v246, 0.0
    %v515 = vsel %vm395, %v247, 0.0
    %v516 = vsel %vm392, %v248, 0.0
    %v517 = vsel %vm393, %v249, 0.0
    %v518 = vsel %vm394, %v250, 0.0
    %v519 = vsel %vm395, %v251, 0.0
    %v520 = vsel %vm392, %v252, 0.0
    %v521 = vsel %vm393, %v253, 0.0
    %v522 = vsel %vm394, %v254, 0.0
    %v523 = vsel %vm395, %v255, 0.0
    %v524 = vsel %vm392, %v256, 0.0
    %v525 = vsel %vm393, %v257, 0.0
    %v526 = vsel %vm394, %v258, 0.0
    %v527 = vsel %vm395, %v259, 0.0
    %v528 = vsel %vm392, %v260, 0.0
    %v529 = vsel %vm393, %v261, 0.0
    %v530 = vsel %vm394, %v262, 0.0
    %v531 = vsel %vm395, %v263, 0.0
    %v532 = vsel %vm392, %v264, 0.0
    %v533 = vsel %vm393, %v265, 0.0
    %v534 = vsel %vm394, %v266, 0.0
    %v535 = vsel %vm395, %v267, 0.0
    %v536 = vsel %vm392, %v268, 0.0
    %v537 = vsel %vm393, %v269, 0.0
    %v538 = vsel %vm394, %v270, 0.0
    %v539 = vsel %vm395, %v271, 0.0
    %v540 = vsel %vm392, %v272, 0.0
    %v541 = vsel %vm393, %v273, 0.0
    %v542 = vsel %vm394, %v274, 0.0
    %v543 = vsel %vm395, %v275, 0.0
    %v544 = vsel %vm392, %v276, 0.0
    %v545 = vsel %vm393, %v277, 0.0
    %v546 = vsel %vm394, %v278, 0.0
    %v547 = vsel %vm395, %v279, 0.0
    %v548 = vsel %vm392, %v280, 0.0
    %v549 = vsel %vm393, %v281, 0.0
    %v550 = vsel %vm394, %v282, 0.0
    %v551 = vsel %vm395, %v283, 0.0
    %v552 = vsel %vm392, %v284, 0.0
    %v553 = vsel %vm393, %v285, 0.0
    %v554 = vsel %vm394, %v286, 0.0
    %v555 = vsel %vm395, %v287, 0.0
    %v556 = vsel %vm392, %v288, 0.0
    %v557 = vsel %vm393, %v289, 0.0
    %v558 = vsel %vm394, %v290, 0.0
    %v559 = vsel %vm395, %v291, 0.0
    %v560 = vsel %vm392, %v292, 0.0
    %v561 = vsel %vm393, %v293, 0.0
    %v562 = vsel %vm394, %v294, 0.0
    %v563 = vsel %vm395, %v295, 0.0
    %v564 = vsel %vm392, %v296, 0.0
    %v565 = vsel %vm393, %v297, 0.0
    %v566 = vsel %vm394, %v298, 0.0
    %v567 = vsel %vm395, %v299, 0.0
    %v568 = vsel %vm392, %v300, 0.0
    %v569 = vsel %vm393, %v301, 0.0
    %v570 = vsel %vm394, %v302, 0.0
    %v571 = vsel %vm395, %v303, 0.0
    %v572 = vsel %vm392, %v304, 0.0
    %v573 = vsel %vm393, %v305, 0.0
    %v574 = vsel %vm394, %v306, 0.0
    %v575 = vsel %vm395, %v307, 0.0
    %v576 = vsel %vm392, %v308, 0.0
    %v577 = vsel %vm393, %v309, 0.0
    %v578 = vsel %vm394, %v310, 0.0
    %v579 = vsel %vm395, %v311, 0.0
    %v580 = vsel %vm392, %v312, 0.0
    %v581 = vsel %vm393, %v313, 0.0
    %v582 = vsel %vm394, %v314, 0.0
    %v583 = vsel %vm395, %v315, 0.0
    %v584 = vsel %vm392, %v316, 0.0
    %v585 = vsel %vm393, %v317, 0.0
    %v586 = vsel %vm394, %v318, 0.0
    %v587 = vsel %vm395, %v319, 0.0
    %v588 = vsel %vm392, %v320, 0.0
    %v589 = vsel %vm393, %v321, 0.0
    %v590 = vsel %vm394, %v322, 0.0
    %v591 = vsel %vm395, %v323, 0.0
    %v592 = vsel %vm392, %v324, 0.0
    %v593 = vsel %vm393, %v325, 0.0
    %v594 = vsel %vm394, %v326, 0.0
    %v595 = vsel %vm395, %v327, 0.0
    %v596 = vsel %vm392, %v328, 0.0
    %v597 = vsel %vm393, %v329, 0.0
    %v598 = vsel %vm394, %v330, 0.0
    %v599 = vsel %vm395, %v331, 0.0
    %v600 = vsel %vm392, %v332, 0.0
    %v601 = vsel %vm393, %v333, 0.0
    %v602 = vsel %vm394, %v334, 0.0
    %v603 = vsel %vm395, %v335, 0.0
    %v604 = vsel %vm392, %v336, 0.0
    %v605 = vsel %vm393, %v337, 0.0
    %v606 = vsel %vm394, %v338, 0.0
    %v607 = vsel %vm395, %v339, 0.0
    %v608 = vsel %vm392, %v340, 0.0
    %v609 = vsel %vm393, %v341, 0.0
    %v610 = vsel %vm394, %v342, 0.0
    %v611 = vsel %vm395, %v343, 0.0
    %v612 = vsel %vm392, %v344, 0.0
    %v613 = vsel %vm393, %v345, 0.0
    %v614 = vsel %vm394, %v346, 0.0
    %v615 = vsel %vm395, %v347, 0.0
    %v616 = vsel %vm392, %v348, 0.0
    %v617 = vsel %vm393, %v349, 0.0
    %v618 = vsel %vm394, %v350, 0.0
    %v619 = vsel %vm395, %v351, 0.0
    %v620 = vsel %vm392, %v352, 0.0
    %v621 = vsel %vm393, %v353, 0.0
    %v622 = vsel %vm394, %v354, 0.0
    %v623 = vsel %vm395, %v355, 0.0
    %v624 = vsel %vm392, %v356, 0.0
    %v625 = vsel %vm393, %v357, 0.0
    %v626 = vsel %vm394, %v358, 0.0
    %v627 = vsel %vm395, %v359, 0.0
    %v628 = vsel %vm392, %v360, 0.0
    %v629 = vsel %vm393, %v361, 0.0
    %v630 = vsel %vm394, %v362, 0.0
    %v631 = vsel %vm395, %v363, 0.0
    %v632 = vsel %vm392, %v364, 0.0
    %v633 = vsel %vm393, %v365, 0.0
    %v634 = vsel %vm394, %v366, 0.0
    %v635 = vsel %vm395, %v367, 0.0
    %v636 = vsel %vm392, %v368, 0.0
    %v637 = vsel %vm393, %v369, 0.0
    %v638 = vsel %vm394, %v370, 0.0
    %v639 = vsel %vm395, %v371, 0.0
    %v640 = vsel %vm392, %v372, 0.0
    %v641 = vsel %vm393, %v373, 0.0
    %v642 = vsel %vm394, %v374, 0.0
    %v643 = vsel %vm395, %v375, 0.0
    %v644 = vsel %vm392, %v376, 0.0
    %v645 = vsel %vm393, %v377, 0.0
    %v646 = vsel %vm394, %v378, 0.0
    %v647 = vsel %vm395, %v379, 0.0
    %v648 = vsel %vm392, %v380, 0.0
    %v649 = vsel %vm393, %v381, 0.0
    %v650 = vsel %vm394, %v382, 0.0
    %v651 = vsel %vm395, %v383, 0.0
    %v652 = vld [vmem:[#allocation2] sm:$0xff]
    %v653 = vld [vmem:[#allocation2 + $0x8] sm:$0xff]
    %v654 = vld [vmem:[#allocation2 + $0x10] sm:$0xff]
    %v655 = vld [vmem:[#allocation2 + $0x18] sm:$0xff]
    %v656 = vld [vmem:[#allocation2 + $0x20] sm:$0xff]
    %v657 = vld [vmem:[#allocation2 + $0x28] sm:$0xff]
    %v658 = vld [vmem:[#allocation2 + $0x30] sm:$0xff]
    %v659 = vld [vmem:[#allocation2 + $0x38] sm:$0xff]
    %v660 = vld [vmem:[#allocation2 + $0x40] sm:$0xff]
    %v661 = vld [vmem:[#allocation2 + $0x48] sm:$0xff]
    %v662 = vld [vmem:[#allocation2 + $0x50] sm:$0xff]
    %v663 = vld [vmem:[#allocation2 + $0x58] sm:$0xff]
    %v664 = vld [vmem:[#allocation2 + $0x60] sm:$0xff]
    %v665 = vld [vmem:[#allocation2 + $0x68] sm:$0xff]
    %v666 = vld [vmem:[#allocation2 + $0x70] sm:$0xff]
    %v667 = vld [vmem:[#allocation2 + $0x78] sm:$0xff]
    %v668 = vld [vmem:[#allocation2 + $0x80] sm:$0xff]
    %v669 = vld [vmem:[#allocation2 + $0x88] sm:$0xff]
    %v670 = vld [vmem:[#allocation2 + $0x90] sm:$0xff]
    %v671 = vld [vmem:[#allocation2 + $0x98] sm:$0xff]
    %v672 = vld [vmem:[#allocation2 + $0xa0] sm:$0xff]
    %v673 = vld [vmem:[#allocation2 + $0xa8] sm:$0xff]
    %v674 = vld [vmem:[#allocation2 + $0xb0] sm:$0xff]
    %v675 = vld [vmem:[#allocation2 + $0xb8] sm:$0xff]
    %v676 = vld [vmem:[#allocation2 + $0xc0] sm:$0xff]
    %v677 = vld [vmem:[#allocation2 + $0xc8] sm:$0xff]
    %v678 = vld [vmem:[#allocation2 + $0xd0] sm:$0xff]
    %v679 = vld [vmem:[#allocation2 + $0xd8] sm:$0xff]
    %v680 = vld [vmem:[#allocation2 + $0xe0] sm:$0xff]
    %v681 = vld [vmem:[#allocation2 + $0xe8] sm:$0xff]
    %v682 = vld [vmem:[#allocation2 + $0xf0] sm:$0xff]
    %v683 = vld [vmem:[#allocation2 + $0xf8] sm:$0xff]
    %v684 = vld [vmem:[#allocation2 + $0x100] sm:$0xff]
    %v685 = vld [vmem:[#allocation2 + $0x108] sm:$0xff]
    %v686 = vld [vmem:[#allocation2 + $0x110] sm:$0xff]
    %v687 = vld [vmem:[#allocation2 + $0x118] sm:$0xff]
    %v688 = vld [vmem:[#allocation2 + $0x120] sm:$0xff]
    %v689 = vld [vmem:[#allocation2 + $0x128] sm:$0xff]
    %v690 = vld [vmem:[#allocation2 + $0x130] sm:$0xff]
    %v691 = vld [vmem:[#allocation2 + $0x138] sm:$0xff]
    %v692 = vld [vmem:[#allocation2 + $0x140] sm:$0xff]
    %v693 = vld [vmem:[#allocation2 + $0x148] sm:$0xff]
    %v694 = vld [vmem:[#allocation2 + $0x150] sm:$0xff]
    %v695 = vld [vmem:[#allocation2 + $0x158] sm:$0xff]
    %v696 = vld [vmem:[#allocation2 + $0x160] sm:$0xff]
    %v697 = vld [vmem:[#allocation2 + $0x168] sm:$0xff]
    %v698 = vld [vmem:[#allocation2 + $0x170] sm:$0xff]
    %v699 = vld [vmem:[#allocation2 + $0x178] sm:$0xff]
    %v700 = vld [vmem:[#allocation2 + $0x180] sm:$0xff]
    %v701 = vld [vmem:[#allocation2 + $0x188] sm:$0xff]
    %v702 = vld [vmem:[#allocation2 + $0x190] sm:$0xff]
    %v703 = vld [vmem:[#allocation2 + $0x198] sm:$0xff]
    %v704 = vld [vmem:[#allocation2 + $0x1a0] sm:$0xff]
    %v705 = vld [vmem:[#allocation2 + $0x1a8] sm:$0xff]
    %v706 = vld [vmem:[#allocation2 + $0x1b0] sm:$0xff]
    %v707 = vld [vmem:[#allocation2 + $0x1b8] sm:$0xff]
    %v708 = vld [vmem:[#allocation2 + $0x1c0] sm:$0xff]
    %v709 = vld [vmem:[#allocation2 + $0x1c8] sm:$0xff]
    %v710 = vld [vmem:[#allocation2 + $0x1d0] sm:$0xff]
    %v711 = vld [vmem:[#allocation2 + $0x1d8] sm:$0xff]
    %v712 = vld [vmem:[#allocation2 + $0x1e0] sm:$0xff]
    %v713 = vld [vmem:[#allocation2 + $0x1e8] sm:$0xff]
    %v714 = vld [vmem:[#allocation2 + $0x1f0] sm:$0xff]
    %v715 = vld [vmem:[#allocation2 + $0x1f8] sm:$0xff]
    %v716 = vpack.c.bf16 %v400, %v396
    %v717 = vpack.c.bf16 %v401, %v397
    %v718 = vpack.c.bf16 %v402, %v398
    %v719 = vpack.c.bf16 %v403, %v399
    %v720 = vpack.c.bf16 %v408, %v404
    %v721 = vpack.c.bf16 %v409, %v405
    %v722 = vpack.c.bf16 %v410, %v406
    %v723 = vpack.c.bf16 %v411, %v407
    %v724 = vpack.c.bf16 %v416, %v412
    %v725 = vpack.c.bf16 %v417, %v413
    %v726 = vpack.c.bf16 %v418, %v414
    %v727 = vpack.c.bf16 %v419, %v415
    %v728 = vpack.c.bf16 %v424, %v420
    %v729 = vpack.c.bf16 %v425, %v421
    %v730 = vpack.c.bf16 %v426, %v422
    %v731 = vpack.c.bf16 %v427, %v423
    %v732 = vpack.c.bf16 %v432, %v428
    %v733 = vpack.c.bf16 %v433, %v429
    %v734 = vpack.c.bf16 %v434, %v430
    %v735 = vpack.c.bf16 %v435, %v431
    %v736 = vpack.c.bf16 %v440, %v436
    %v737 = vpack.c.bf16 %v441, %v437
    %v738 = vpack.c.bf16 %v442, %v438
    %v739 = vpack.c.bf16 %v443, %v439
    %v740 = vpack.c.bf16 %v448, %v444
    %v741 = vpack.c.bf16 %v449, %v445
    %v742 = vpack.c.bf16 %v450, %v446
    %v743 = vpack.c.bf16 %v451, %v447
    %v744 = vpack.c.bf16 %v456, %v452
    %v745 = vpack.c.bf16 %v457, %v453
    %v746 = vpack.c.bf16 %v458, %v454
    %v747 = vpack.c.bf16 %v459, %v455
    %v748 = vpack.c.bf16 %v464, %v460
    %v749 = vpack.c.bf16 %v465, %v461
    %v750 = vpack.c.bf16 %v466, %v462
    %v751 = vpack.c.bf16 %v467, %v463
    %v752 = vpack.c.bf16 %v472, %v468
    %v753 = vpack.c.bf16 %v473, %v469
    %v754 = vpack.c.bf16 %v474, %v470
    %v755 = vpack.c.bf16 %v475, %v471
    %v756 = vpack.c.bf16 %v480, %v476
    %v757 = vpack.c.bf16 %v481, %v477
    %v758 = vpack.c.bf16 %v482, %v478
    %v759 = vpack.c.bf16 %v483, %v479
    %v760 = vpack.c.bf16 %v488, %v484
    %v761 = vpack.c.bf16 %v489, %v485
    %v762 = vpack.c.bf16 %v490, %v486
    %v763 = vpack.c.bf16 %v491, %v487
    %v764 = vpack.c.bf16 %v496, %v492
    %v765 = vpack.c.bf16 %v497, %v493
    %v766 = vpack.c.bf16 %v498, %v494
    %v767 = vpack.c.bf16 %v499, %v495
    %v768 = vpack.c.bf16 %v504, %v500
    %v769 = vpack.c.bf16 %v505, %v501
    %v770 = vpack.c.bf16 %v506, %v502
    %v771 = vpack.c.bf16 %v507, %v503
    %v772 = vpack.c.bf16 %v512, %v508
    %v773 = vpack.c.bf16 %v513, %v509
    %v774 = vpack.c.bf16 %v514, %v510
    %v775 = vpack.c.bf16 %v515, %v511
    %v776 = vpack.c.bf16 %v520, %v516
    %v777 = vpack.c.bf16 %v521, %v517
    %v778 = vpack.c.bf16 %v522, %v518
    %v779 = vpack.c.bf16 %v523, %v519
    %v780 = vpack.c.bf16 %v528, %v524
    %v781 = vpack.c.bf16 %v529, %v525
    %v782 = vpack.c.bf16 %v530, %v526
    %v783 = vpack.c.bf16 %v531, %v527
    %v784 = vpack.c.bf16 %v536, %v532
    %v785 = vpack.c.bf16 %v537, %v533
    %v786 = vpack.c.bf16 %v538, %v534
    %v787 = vpack.c.bf16 %v539, %v535
    %v788 = vpack.c.bf16 %v544, %v540
    %v789 = vpack.c.bf16 %v545, %v541
    %v790 = vpack.c.bf16 %v546, %v542
    %v791 = vpack.c.bf16 %v547, %v543
    %v792 = vpack.c.bf16 %v552, %v548
    %v793 = vpack.c.bf16 %v553, %v549
    %v794 = vpack.c.bf16 %v554, %v550
    %v795 = vpack.c.bf16 %v555, %v551
    %v796 = vpack.c.bf16 %v560, %v556
    %v797 = vpack.c.bf16 %v561, %v557
    %v798 = vpack.c.bf16 %v562, %v558
    %v799 = vpack.c.bf16 %v563, %v559
    %v800 = vpack.c.bf16 %v568, %v564
    %v801 = vpack.c.bf16 %v569, %v565
    %v802 = vpack.c.bf16 %v570, %v566
    %v803 = vpack.c.bf16 %v571, %v567
    %v804 = vpack.c.bf16 %v576, %v572
    %v805 = vpack.c.bf16 %v577, %v573
    %v806 = vpack.c.bf16 %v578, %v574
    %v807 = vpack.c.bf16 %v579, %v575
    %v808 = vpack.c.bf16 %v584, %v580
    %v809 = vpack.c.bf16 %v585, %v581
    %v810 = vpack.c.bf16 %v586, %v582
    %v811 = vpack.c.bf16 %v587, %v583
    %v812 = vpack.c.bf16 %v592, %v588
    %v813 = vpack.c.bf16 %v593, %v589
    %v814 = vpack.c.bf16 %v594, %v590
    %v815 = vpack.c.bf16 %v595, %v591
    %v816 = vpack.c.bf16 %v600, %v596
    %v817 = vpack.c.bf16 %v601, %v597
    %v818 = vpack.c.bf16 %v602, %v598
    %v819 = vpack.c.bf16 %v603, %v599
    %v820 = vpack.c.bf16 %v608, %v604
    %v821 = vpack.c.bf16 %v609, %v605
    %v822 = vpack.c.bf16 %v610, %v606
    %v823 = vpack.c.bf16 %v611, %v607
    %v824 = vpack.c.bf16 %v616, %v612
    %v825 = vpack.c.bf16 %v617, %v613
    %v826 = vpack.c.bf16 %v618, %v614
    %v827 = vpack.c.bf16 %v619, %v615
    %v828 = vpack.c.bf16 %v624, %v620
    %v829 = vpack.c.bf16 %v625, %v621
    %v830 = vpack.c.bf16 %v626, %v622
    %v831 = vpack.c.bf16 %v627, %v623
    %v832 = vpack.c.bf16 %v632, %v628
    %v833 = vpack.c.bf16 %v633, %v629
    %v834 = vpack.c.bf16 %v634, %v630
    %v835 = vpack.c.bf16 %v635, %v631
    %v836 = vpack.c.bf16 %v640, %v636
    %v837 = vpack.c.bf16 %v641, %v637
    %v838 = vpack.c.bf16 %v642, %v638
    %v839 = vpack.c.bf16 %v643, %v639
    %v840 = vpack.c.bf16 %v648, %v644
    %v841 = vpack.c.bf16 %v649, %v645
    %v842 = vpack.c.bf16 %v650, %v646
    %v843 = vpack.c.bf16 %v651, %v647
    %s844 = sshra.s32 %s389, 3
    %s845 = sand.u32 %s389, 7
    %s846 = smul.addr %s844, 4
    %s847 = scalar_lea.vmem [#allocation6], %s846
    %v848 = vld [vmem:[%s847] sm:$0xf]
    %v849 = vld [vmem:[%s847 + $0x4] sm:$0xf]
    %v850 = vld [vmem:[%s847 + $0x8] sm:$0xf]
    %v851 = vld [vmem:[%s847 + $0xc] sm:$0xf]
    %v852 = vld [vmem:[%s847 + $0x10] sm:$0xf]
    %v853 = vld [vmem:[%s847 + $0x14] sm:$0xf]
    %v854 = vld [vmem:[%s847 + $0x18] sm:$0xf]
    %v855 = vld [vmem:[%s847 + $0x1c] sm:$0xf]
    %v856 = vld [vmem:[%s847 + $0x20] sm:$0xf]
    %v857 = vld [vmem:[%s847 + $0x24] sm:$0xf]
    %v858 = vld [vmem:[%s847 + $0x28] sm:$0xf]
    %v859 = vld [vmem:[%s847 + $0x2c] sm:$0xf]
    %v860 = vld [vmem:[%s847 + $0x30] sm:$0xf]
    %v861 = vld [vmem:[%s847 + $0x34] sm:$0xf]
    %v862 = vld [vmem:[%s847 + $0x38] sm:$0xf]
    %v863 = vld [vmem:[%s847 + $0x3c] sm:$0xf]
    %v864 = vld [vmem:[%s847 + $0x40] sm:$0xf]
    %v865 = vld [vmem:[%s847 + $0x44] sm:$0xf]
    %v866 = vld [vmem:[%s847 + $0x48] sm:$0xf]
    %v867 = vld [vmem:[%s847 + $0x4c] sm:$0xf]
    %v868 = vld [vmem:[%s847 + $0x50] sm:$0xf]
    %v869 = vld [vmem:[%s847 + $0x54] sm:$0xf]
    %v870 = vld [vmem:[%s847 + $0x58] sm:$0xf]
    %v871 = vld [vmem:[%s847 + $0x5c] sm:$0xf]
    %v872 = vld [vmem:[%s847 + $0x60] sm:$0xf]
    %v873 = vld [vmem:[%s847 + $0x64] sm:$0xf]
    %v874 = vld [vmem:[%s847 + $0x68] sm:$0xf]
    %v875 = vld [vmem:[%s847 + $0x6c] sm:$0xf]
    %v876 = vld [vmem:[%s847 + $0x70] sm:$0xf]
    %v877 = vld [vmem:[%s847 + $0x74] sm:$0xf]
    %v878 = vld [vmem:[%s847 + $0x78] sm:$0xf]
    %v879 = vld [vmem:[%s847 + $0x7c] sm:$0xf]
    %v880 = vld [vmem:[%s847 + $0x80] sm:$0xf]
    %v881 = vld [vmem:[%s847 + $0x84] sm:$0xf]
    %v882 = vld [vmem:[%s847 + $0x88] sm:$0xf]
    %v883 = vld [vmem:[%s847 + $0x8c] sm:$0xf]
    %v884 = vld [vmem:[%s847 + $0x90] sm:$0xf]
    %v885 = vld [vmem:[%s847 + $0x94] sm:$0xf]
    %v886 = vld [vmem:[%s847 + $0x98] sm:$0xf]
    %v887 = vld [vmem:[%s847 + $0x9c] sm:$0xf]
    %v888 = vld [vmem:[%s847 + $0xa0] sm:$0xf]
    %v889 = vld [vmem:[%s847 + $0xa4] sm:$0xf]
    %v890 = vld [vmem:[%s847 + $0xa8] sm:$0xf]
    %v891 = vld [vmem:[%s847 + $0xac] sm:$0xf]
    %v892 = vld [vmem:[%s847 + $0xb0] sm:$0xf]
    %v893 = vld [vmem:[%s847 + $0xb4] sm:$0xf]
    %v894 = vld [vmem:[%s847 + $0xb8] sm:$0xf]
    %v895 = vld [vmem:[%s847 + $0xbc] sm:$0xf]
    %v896 = vld [vmem:[%s847 + $0xc0] sm:$0xf]
    %v897 = vld [vmem:[%s847 + $0xc4] sm:$0xf]
    %v898 = vld [vmem:[%s847 + $0xc8] sm:$0xf]
    %v899 = vld [vmem:[%s847 + $0xcc] sm:$0xf]
    %v900 = vld [vmem:[%s847 + $0xd0] sm:$0xf]
    %v901 = vld [vmem:[%s847 + $0xd4] sm:$0xf]
    %v902 = vld [vmem:[%s847 + $0xd8] sm:$0xf]
    %v903 = vld [vmem:[%s847 + $0xdc] sm:$0xf]
    %v904 = vld [vmem:[%s847 + $0xe0] sm:$0xf]
    %v905 = vld [vmem:[%s847 + $0xe4] sm:$0xf]
    %v906 = vld [vmem:[%s847 + $0xe8] sm:$0xf]
    %v907 = vld [vmem:[%s847 + $0xec] sm:$0xf]
    %v908 = vld [vmem:[%s847 + $0xf0] sm:$0xf]
    %v909 = vld [vmem:[%s847 + $0xf4] sm:$0xf]
    %v910 = vld [vmem:[%s847 + $0xf8] sm:$0xf]
    %v911 = vld [vmem:[%s847 + $0xfc] sm:$0xf]
    %v976 = vunpack.c.l.b16 %v848
    %v977 = vunpack.c.l.b16 %v849
    %v978 = vunpack.c.l.b16 %v850
    %v979 = vunpack.c.l.b16 %v851
    %v980 = vunpack.c.l.b16 %v852
    %v981 = vunpack.c.l.b16 %v853
    %v982 = vunpack.c.l.b16 %v854
    %v983 = vunpack.c.l.b16 %v855
    %v984 = vunpack.c.l.b16 %v856
    %v985 = vunpack.c.l.b16 %v857
    %v986 = vunpack.c.l.b16 %v858
    %v987 = vunpack.c.l.b16 %v859
    %v988 = vunpack.c.l.b16 %v860
    %v989 = vunpack.c.l.b16 %v861
    %v990 = vunpack.c.l.b16 %v862
    %v991 = vunpack.c.l.b16 %v863
    %v992 = vunpack.c.l.b16 %v864
    %v993 = vunpack.c.l.b16 %v865
    %v994 = vunpack.c.l.b16 %v866
    %v995 = vunpack.c.l.b16 %v867
    %v996 = vunpack.c.l.b16 %v868
    %v997 = vunpack.c.l.b16 %v869
    %v998 = vunpack.c.l.b16 %v870
    %v999 = vunpack.c.l.b16 %v871
    %v1000 = vunpack.c.l.b16 %v872
    %v1001 = vunpack.c.l.b16 %v873
    %v1002 = vunpack.c.l.b16 %v874
    %v1003 = vunpack.c.l.b16 %v875
    %v1004 = vunpack.c.l.b16 %v876
    %v1005 = vunpack.c.l.b16 %v877
    %v1006 = vunpack.c.l.b16 %v878
    %v1007 = vunpack.c.l.b16 %v879
    %v1008 = vunpack.c.l.b16 %v880
    %v1009 = vunpack.c.l.b16 %v881
    %v1010 = vunpack.c.l.b16 %v882
    %v1011 = vunpack.c.l.b16 %v883
    %v1012 = vunpack.c.l.b16 %v884
    %v1013 = vunpack.c.l.b16 %v885
    %v1014 = vunpack.c.l.b16 %v886
    %v1015 = vunpack.c.l.b16 %v887
    %v1016 = vunpack.c.l.b16 %v888
    %v1017 = vunpack.c.l.b16 %v889
    %v1018 = vunpack.c.l.b16 %v890
    %v1019 = vunpack.c.l.b16 %v891
    %v1020 = vunpack.c.l.b16 %v892
    %v1021 = vunpack.c.l.b16 %v893
    %v1022 = vunpack.c.l.b16 %v894
    %v1023 = vunpack.c.l.b16 %v895
    %v1024 = vunpack.c.l.b16 %v896
    %v1025 = vunpack.c.l.b16 %v897
    %v1026 = vunpack.c.l.b16 %v898
    %v1027 = vunpack.c.l.b16 %v899
    %v1028 = vunpack.c.l.b16 %v900
    %v1029 = vunpack.c.l.b16 %v901
    %v1030 = vunpack.c.l.b16 %v902
    %v1031 = vunpack.c.l.b16 %v903
    %v1032 = vunpack.c.l.b16 %v904
    %v1033 = vunpack.c.l.b16 %v905
    %v1034 = vunpack.c.l.b16 %v906
    %v1035 = vunpack.c.l.b16 %v907
    %v1036 = vunpack.c.l.b16 %v908
    %v1037 = vunpack.c.l.b16 %v909
    %v1038 = vunpack.c.l.b16 %v910
    %v1039 = vunpack.c.l.b16 %v911
    %v1040 = vpack.c.b16 %v977, %v976
    %v1041 = vpack.c.b16 %v979, %v978
    %v1042 = vpack.c.b16 %v981, %v980
    %v1043 = vpack.c.b16 %v983, %v982
    %v1044 = vpack.c.b16 %v985, %v984
    %v1045 = vpack.c.b16 %v987, %v986
    %v1046 = vpack.c.b16 %v989, %v988
    %v1047 = vpack.c.b16 %v991, %v990
    %v1048 = vpack.c.b16 %v993, %v992
    %v1049 = vpack.c.b16 %v995, %v994
    %v1050 = vpack.c.b16 %v997, %v996
    %v1051 = vpack.c.b16 %v999, %v998
    %v1052 = vpack.c.b16 %v1001, %v1000
    %v1053 = vpack.c.b16 %v1003, %v1002
    %v1054 = vpack.c.b16 %v1005, %v1004
    %v1055 = vpack.c.b16 %v1007, %v1006
    %v1056 = vpack.c.b16 %v1009, %v1008
    %v1057 = vpack.c.b16 %v1011, %v1010
    %v1058 = vpack.c.b16 %v1013, %v1012
    %v1059 = vpack.c.b16 %v1015, %v1014
    %v1060 = vpack.c.b16 %v1017, %v1016
    %v1061 = vpack.c.b16 %v1019, %v1018
    %v1062 = vpack.c.b16 %v1021, %v1020
    %v1063 = vpack.c.b16 %v1023, %v1022
    %v1064 = vpack.c.b16 %v1025, %v1024
    %v1065 = vpack.c.b16 %v1027, %v1026
    %v1066 = vpack.c.b16 %v1029, %v1028
    %v1067 = vpack.c.b16 %v1031, %v1030
    %v1068 = vpack.c.b16 %v1033, %v1032
    %v1069 = vpack.c.b16 %v1035, %v1034
    %v1070 = vpack.c.b16 %v1037, %v1036
    %v1071 = vpack.c.b16 %v1039, %v1038
    %1104 = vmatprep.subr.bf16.mxu0 0
    %1105 = vmatpush1.bf16.msra.mxu0 %v1047
    %1106 = vmatprep.subr.bf16.mxu0 0
    %1107 = vmatpush1.bf16.msra.mxu0 %v1046
    %1108 = vmatprep.subr.bf16.mxu0 0
    %1109 = vmatpush1.bf16.msra.mxu0 %v1045
    %1110 = vmatprep.subr.bf16.mxu0 0
    %1111 = vmatpush1.bf16.msra.mxu0 %v1044
    %1112 = vmatprep.subr.bf16.mxu0 0
    %1113 = vmatpush1.bf16.msra.mxu0 %v1043
    %1114 = vmatprep.subr.bf16.mxu0 0
    %1115 = vmatpush1.bf16.msra.mxu0 %v1042
    %1116 = vmatprep.subr.bf16.mxu0 0
    %1117 = vmatpush1.bf16.msra.mxu0 %v1041
    %1118 = vmatprep.subr.bf16.mxu0 0
    %1119 = vmatpush1.bf16.msra.mxu0 %v1040
    %1120 = vmatprep.subr.bf16.mxu0 0
    %1121 = vmatpush2.bf16.msra.mxu0 %v1055
    %1122 = vmatprep.subr.bf16.mxu0 0
    %1123 = vmatpush2.bf16.msra.mxu0 %v1054
    %1124 = vmatprep.subr.bf16.mxu0 0
    %1125 = vmatpush2.bf16.msra.mxu0 %v1053
    %1126 = vmatprep.subr.bf16.mxu0 0
    %1127 = vmatpush2.bf16.msra.mxu0 %v1052
    %1128 = vmatprep.subr.bf16.mxu0 0
    %1129 = vmatpush2.bf16.msra.mxu0 %v1051
    %1130 = vmatprep.subr.bf16.mxu0 0
    %1131 = vmatpush2.bf16.msra.mxu0 %v1050
    %1132 = vmatprep.subr.bf16.mxu0 0
    %1133 = vmatpush2.bf16.msra.mxu0 %v1049
    %1134 = vmatprep.subr.bf16.mxu0 0
    %1135 = vmatpush2.bf16.msra.mxu0 %v1048
    %1136 = vmatprep.mubr.bf16.mxu0 %v717
    %1137 = vmatmul.mubr.bf16.gmra.mxu0 %v716
    %v1138 = vpop.f32.mrf.mxu0
    %v1139 = vadd.f32 0.0, %v1138
    %v1140 = vpop.f32.mrf.mxu0
    %v1141 = vpop.f32.mrf.mxu0
    %v1142 = vadd.f32 0.0, %v1141
    %v1143 = vpop.f32.mrf.mxu0
    %1144 = vmatprep.mubr.bf16.mxu0 %v721
    %1145 = vmatmul.mubr.bf16.gmra.mxu0 %v720
    %v1146 = vpop.f32.mrf.mxu0
    %v1147 = vadd.f32 0.0, %v1146
    %v1148 = vpop.f32.mrf.mxu0
    %v1149 = vpop.f32.mrf.mxu0
    %v1150 = vadd.f32 0.0, %v1149
    %v1151 = vpop.f32.mrf.mxu0
    %1152 = vmatprep.mubr.bf16.mxu0 %v725
    %1153 = vmatmul.mubr.bf16.gmra.mxu0 %v724
    %v1154 = vpop.f32.mrf.mxu0
    %v1155 = vadd.f32 0.0, %v1154
    %v1156 = vpop.f32.mrf.mxu0
    %v1157 = vpop.f32.mrf.mxu0
    %v1158 = vadd.f32 0.0, %v1157
    %v1159 = vpop.f32.mrf.mxu0
    %1160 = vmatprep.mubr.bf16.mxu0 %v729
    %1161 = vmatmul.mubr.bf16.gmra.mxu0 %v728
    %v1162 = vpop.f32.mrf.mxu0
    %v1163 = vadd.f32 0.0, %v1162
    %v1164 = vpop.f32.mrf.mxu0
    %v1165 = vpop.f32.mrf.mxu0
    %v1166 = vadd.f32 0.0, %v1165
    %v1167 = vpop.f32.mrf.mxu0
    %1168 = vmatprep.mubr.bf16.mxu0 %v733
    %1169 = vmatmul.mubr.bf16.gmra.mxu0 %v732
    %v1170 = vpop.f32.mrf.mxu0
    %v1171 = vadd.f32 0.0, %v1170
    %v1172 = vpop.f32.mrf.mxu0
    %v1173 = vpop.f32.mrf.mxu0
    %v1174 = vadd.f32 0.0, %v1173
    %v1175 = vpop.f32.mrf.mxu0
    %1176 = vmatprep.mubr.bf16.mxu0 %v737
    %1177 = vmatmul.mubr.bf16.gmra.mxu0 %v736
    %v1178 = vpop.f32.mrf.mxu0
    %v1179 = vadd.f32 0.0, %v1178
    %v1180 = vpop.f32.mrf.mxu0
    %v1181 = vpop.f32.mrf.mxu0
    %v1182 = vadd.f32 0.0, %v1181
    %v1183 = vpop.f32.mrf.mxu0
    %1184 = vmatprep.mubr.bf16.mxu0 %v741
    %1185 = vmatmul.mubr.bf16.gmra.mxu0 %v740
    %v1186 = vpop.f32.mrf.mxu0
    %v1187 = vadd.f32 0.0, %v1186
    %v1188 = vpop.f32.mrf.mxu0
    %v1189 = vpop.f32.mrf.mxu0
    %v1190 = vadd.f32 0.0, %v1189
    %v1191 = vpop.f32.mrf.mxu0
    %1192 = vmatprep.mubr.bf16.mxu0 %v745
    %1193 = vmatmul.mubr.bf16.gmra.mxu0 %v744
    %v1194 = vpop.f32.mrf.mxu0
    %v1195 = vadd.f32 0.0, %v1194
    %v1196 = vpop.f32.mrf.mxu0
    %v1197 = vpop.f32.mrf.mxu0
    %v1198 = vadd.f32 0.0, %v1197
    %v1199 = vpop.f32.mrf.mxu0
    %1200 = vmatprep.mubr.bf16.mxu0 %v749
    %1201 = vmatmul.mubr.bf16.gmra.mxu0 %v748
    %v1202 = vpop.f32.mrf.mxu0
    %v1203 = vadd.f32 0.0, %v1202
    %v1204 = vpop.f32.mrf.mxu0
    %v1205 = vpop.f32.mrf.mxu0
    %v1206 = vadd.f32 0.0, %v1205
    %v1207 = vpop.f32.mrf.mxu0
    %1208 = vmatprep.mubr.bf16.mxu0 %v753
    %1209 = vmatmul.mubr.bf16.gmra.mxu0 %v752
    %v1210 = vpop.f32.mrf.mxu0
    %v1211 = vadd.f32 0.0, %v1210
    %v1212 = vpop.f32.mrf.mxu0
    %v1213 = vpop.f32.mrf.mxu0
    %v1214 = vadd.f32 0.0, %v1213
    %v1215 = vpop.f32.mrf.mxu0
    %1216 = vmatprep.mubr.bf16.mxu0 %v757
    %1217 = vmatmul.mubr.bf16.gmra.mxu0 %v756
    %v1218 = vpop.f32.mrf.mxu0
    %v1219 = vadd.f32 0.0, %v1218
    %v1220 = vpop.f32.mrf.mxu0
    %v1221 = vpop.f32.mrf.mxu0
    %v1222 = vadd.f32 0.0, %v1221
    %v1223 = vpop.f32.mrf.mxu0
    %1224 = vmatprep.mubr.bf16.mxu0 %v761
    %1225 = vmatmul.mubr.bf16.gmra.mxu0 %v760
    %v1226 = vpop.f32.mrf.mxu0
    %v1227 = vadd.f32 0.0, %v1226
    %v1228 = vpop.f32.mrf.mxu0
    %v1229 = vpop.f32.mrf.mxu0
    %v1230 = vadd.f32 0.0, %v1229
    %v1231 = vpop.f32.mrf.mxu0
    %1232 = vmatprep.mubr.bf16.mxu0 %v765
    %1233 = vmatmul.mubr.bf16.gmra.mxu0 %v764
    %v1234 = vpop.f32.mrf.mxu0
    %v1235 = vadd.f32 0.0, %v1234
    %v1236 = vpop.f32.mrf.mxu0
    %v1237 = vpop.f32.mrf.mxu0
    %v1238 = vadd.f32 0.0, %v1237
    %v1239 = vpop.f32.mrf.mxu0
    %1240 = vmatprep.mubr.bf16.mxu0 %v769
    %1241 = vmatmul.mubr.bf16.gmra.mxu0 %v768
    %v1242 = vpop.f32.mrf.mxu0
    %v1243 = vadd.f32 0.0, %v1242
    %v1244 = vpop.f32.mrf.mxu0
    %v1245 = vpop.f32.mrf.mxu0
    %v1246 = vadd.f32 0.0, %v1245
    %v1247 = vpop.f32.mrf.mxu0
    %1248 = vmatprep.mubr.bf16.mxu0 %v773
    %1249 = vmatmul.mubr.bf16.gmra.mxu0 %v772
    %v1250 = vpop.f32.mrf.mxu0
    %v1251 = vadd.f32 0.0, %v1250
    %v1252 = vpop.f32.mrf.mxu0
    %v1253 = vpop.f32.mrf.mxu0
    %v1254 = vadd.f32 0.0, %v1253
    %v1255 = vpop.f32.mrf.mxu0
    %1256 = vmatprep.mubr.bf16.mxu0 %v777
    %1257 = vmatmul.mubr.bf16.gmra.mxu0 %v776
    %v1258 = vpop.f32.mrf.mxu0
    %v1259 = vadd.f32 0.0, %v1258
    %v1260 = vpop.f32.mrf.mxu0
    %v1261 = vpop.f32.mrf.mxu0
    %v1262 = vadd.f32 0.0, %v1261
    %v1263 = vpop.f32.mrf.mxu0
    %1264 = vmatprep.mubr.bf16.mxu0 %v781
    %1265 = vmatmul.mubr.bf16.gmra.mxu0 %v780
    %v1266 = vpop.f32.mrf.mxu0
    %v1267 = vadd.f32 0.0, %v1266
    %v1268 = vpop.f32.mrf.mxu0
    %v1269 = vpop.f32.mrf.mxu0
    %v1270 = vadd.f32 0.0, %v1269
    %v1271 = vpop.f32.mrf.mxu0
    %1272 = vmatprep.mubr.bf16.mxu0 %v785
    %1273 = vmatmul.mubr.bf16.gmra.mxu0 %v784
    %v1274 = vpop.f32.mrf.mxu0
    %v1275 = vadd.f32 0.0, %v1274
    %v1276 = vpop.f32.mrf.mxu0
    %v1277 = vpop.f32.mrf.mxu0
    %v1278 = vadd.f32 0.0, %v1277
    %v1279 = vpop.f32.mrf.mxu0
    %1280 = vmatprep.mubr.bf16.mxu0 %v789
    %1281 = vmatmul.mubr.bf16.gmra.mxu0 %v788
    %v1282 = vpop.f32.mrf.mxu0
    %v1283 = vadd.f32 0.0, %v1282
    %v1284 = vpop.f32.mrf.mxu0
    %v1285 = vpop.f32.mrf.mxu0
    %v1286 = vadd.f32 0.0, %v1285
    %v1287 = vpop.f32.mrf.mxu0
    %1288 = vmatprep.mubr.bf16.mxu0 %v793
    %1289 = vmatmul.mubr.bf16.gmra.mxu0 %v792
    %v1290 = vpop.f32.mrf.mxu0
    %v1291 = vadd.f32 0.0, %v1290
    %v1292 = vpop.f32.mrf.mxu0
    %v1293 = vpop.f32.mrf.mxu0
    %v1294 = vadd.f32 0.0, %v1293
    %v1295 = vpop.f32.mrf.mxu0
    %1296 = vmatprep.mubr.bf16.mxu0 %v797
    %1297 = vmatmul.mubr.bf16.gmra.mxu0 %v796
    %v1298 = vpop.f32.mrf.mxu0
    %v1299 = vadd.f32 0.0, %v1298
    %v1300 = vpop.f32.mrf.mxu0
    %v1301 = vpop.f32.mrf.mxu0
    %v1302 = vadd.f32 0.0, %v1301
    %v1303 = vpop.f32.mrf.mxu0
    %1304 = vmatprep.mubr.bf16.mxu0 %v801
    %1305 = vmatmul.mubr.bf16.gmra.mxu0 %v800
    %v1306 = vpop.f32.mrf.mxu0
    %v1307 = vadd.f32 0.0, %v1306
    %v1308 = vpop.f32.mrf.mxu0
    %v1309 = vpop.f32.mrf.mxu0
    %v1310 = vadd.f32 0.0, %v1309
    %v1311 = vpop.f32.mrf.mxu0
    %1312 = vmatprep.mubr.bf16.mxu0 %v805
    %1313 = vmatmul.mubr.bf16.gmra.mxu0 %v804
    %v1314 = vpop.f32.mrf.mxu0
    %v1315 = vadd.f32 0.0, %v1314
    %v1316 = vpop.f32.mrf.mxu0
    %v1317 = vpop.f32.mrf.mxu0
    %v1318 = vadd.f32 0.0, %v1317
    %v1319 = vpop.f32.mrf.mxu0
    %1320 = vmatprep.mubr.bf16.mxu0 %v809
    %1321 = vmatmul.mubr.bf16.gmra.mxu0 %v808
    %v1322 = vpop.f32.mrf.mxu0
    %v1323 = vadd.f32 0.0, %v1322
    %v1324 = vpop.f32.mrf.mxu0
    %v1325 = vpop.f32.mrf.mxu0
    %v1326 = vadd.f32 0.0, %v1325
    %v1327 = vpop.f32.mrf.mxu0
    %1328 = vmatprep.mubr.bf16.mxu0 %v813
    %1329 = vmatmul.mubr.bf16.gmra.mxu0 %v812
    %v1330 = vpop.f32.mrf.mxu0
    %v1331 = vadd.f32 0.0, %v1330
    %v1332 = vpop.f32.mrf.mxu0
    %v1333 = vpop.f32.mrf.mxu0
    %v1334 = vadd.f32 0.0, %v1333
    %v1335 = vpop.f32.mrf.mxu0
    %1336 = vmatprep.mubr.bf16.mxu0 %v817
    %1337 = vmatmul.mubr.bf16.gmra.mxu0 %v816
    %v1338 = vpop.f32.mrf.mxu0
    %v1339 = vadd.f32 0.0, %v1338
    %v1340 = vpop.f32.mrf.mxu0
    %v1341 = vpop.f32.mrf.mxu0
    %v1342 = vadd.f32 0.0, %v1341
    %v1343 = vpop.f32.mrf.mxu0
    %1344 = vmatprep.mubr.bf16.mxu0 %v821
    %1345 = vmatmul.mubr.bf16.gmra.mxu0 %v820
    %v1346 = vpop.f32.mrf.mxu0
    %v1347 = vadd.f32 0.0, %v1346
    %v1348 = vpop.f32.mrf.mxu0
    %v1349 = vpop.f32.mrf.mxu0
    %v1350 = vadd.f32 0.0, %v1349
    %v1351 = vpop.f32.mrf.mxu0
    %1352 = vmatprep.mubr.bf16.mxu0 %v825
    %1353 = vmatmul.mubr.bf16.gmra.mxu0 %v824
    %v1354 = vpop.f32.mrf.mxu0
    %v1355 = vadd.f32 0.0, %v1354
    %v1356 = vpop.f32.mrf.mxu0
    %v1357 = vpop.f32.mrf.mxu0
    %v1358 = vadd.f32 0.0, %v1357
    %v1359 = vpop.f32.mrf.mxu0
    %1360 = vmatprep.mubr.bf16.mxu0 %v829
    %1361 = vmatmul.mubr.bf16.gmra.mxu0 %v828
    %v1362 = vpop.f32.mrf.mxu0
    %v1363 = vadd.f32 0.0, %v1362
    %v1364 = vpop.f32.mrf.mxu0
    %v1365 = vpop.f32.mrf.mxu0
    %v1366 = vadd.f32 0.0, %v1365
    %v1367 = vpop.f32.mrf.mxu0
    %1368 = vmatprep.mubr.bf16.mxu0 %v833
    %1369 = vmatmul.mubr.bf16.gmra.mxu0 %v832
    %v1370 = vpop.f32.mrf.mxu0
    %v1371 = vadd.f32 0.0, %v1370
    %v1372 = vpop.f32.mrf.mxu0
    %v1373 = vpop.f32.mrf.mxu0
    %v1374 = vadd.f32 0.0, %v1373
    %v1375 = vpop.f32.mrf.mxu0
    %1376 = vmatprep.mubr.bf16.mxu0 %v837
    %1377 = vmatmul.mubr.bf16.gmra.mxu0 %v836
    %v1378 = vpop.f32.mrf.mxu0
    %v1379 = vadd.f32 0.0, %v1378
    %v1380 = vpop.f32.mrf.mxu0
    %v1381 = vpop.f32.mrf.mxu0
    %v1382 = vadd.f32 0.0, %v1381
    %v1383 = vpop.f32.mrf.mxu0
    %1384 = vmatprep.mubr.bf16.mxu0 %v841
    %1385 = vmatmul.mubr.bf16.gmra.mxu0 %v840
    %v1386 = vpop.f32.mrf.mxu0
    %v1387 = vadd.f32 0.0, %v1386
    %v1388 = vpop.f32.mrf.mxu0
    %v1389 = vpop.f32.mrf.mxu0
    %v1390 = vadd.f32 0.0, %v1389
    %v1391 = vpop.f32.mrf.mxu0
    %1392 = vdwg.mxu0
    %1393 = vmatprep.subr.bf16.mxu0 0
    %1394 = vmatpush1.bf16.msra.mxu0 %v1063
    %1395 = vmatprep.subr.bf16.mxu0 0
    %1396 = vmatpush1.bf16.msra.mxu0 %v1062
    %1397 = vmatprep.subr.bf16.mxu0 0
    %1398 = vmatpush1.bf16.msra.mxu0 %v1061
    %1399 = vmatprep.subr.bf16.mxu0 0
    %1400 = vmatpush1.bf16.msra.mxu0 %v1060
    %1401 = vmatprep.subr.bf16.mxu0 0
    %1402 = vmatpush1.bf16.msra.mxu0 %v1059
    %1403 = vmatprep.subr.bf16.mxu0 0
    %1404 = vmatpush1.bf16.msra.mxu0 %v1058
    %1405 = vmatprep.subr.bf16.mxu0 0
    %1406 = vmatpush1.bf16.msra.mxu0 %v1057
    %1407 = vmatprep.subr.bf16.mxu0 0
    %1408 = vmatpush1.bf16.msra.mxu0 %v1056
    %1409 = vmatprep.subr.bf16.mxu0 0
    %1410 = vmatpush2.bf16.msra.mxu0 %v1071
    %1411 = vmatprep.subr.bf16.mxu0 0
    %1412 = vmatpush2.bf16.msra.mxu0 %v1070
    %1413 = vmatprep.subr.bf16.mxu0 0
    %1414 = vmatpush2.bf16.msra.mxu0 %v1069
    %1415 = vmatprep.subr.bf16.mxu0 0
    %1416 = vmatpush2.bf16.msra.mxu0 %v1068
    %1417 = vmatprep.subr.bf16.mxu0 0
    %1418 = vmatpush2.bf16.msra.mxu0 %v1067
    %1419 = vmatprep.subr.bf16.mxu0 0
    %1420 = vmatpush2.bf16.msra.mxu0 %v1066
    %1421 = vmatprep.subr.bf16.mxu0 0
    %1422 = vmatpush2.bf16.msra.mxu0 %v1065
    %1423 = vmatprep.subr.bf16.mxu0 0
    %1424 = vmatpush2.bf16.msra.mxu0 %v1064
    %1425 = vmatprep.mubr.bf16.mxu0 %v719
    %1426 = vmatmul.mubr.bf16.gmra.mxu0 %v718
    %v1427 = vpop.f32.mrf.mxu0
    %v1428 = vadd.f32 %v1139, %v1427
    %v1429 = vpop.f32.mrf.mxu0
    %v1430 = vpop.f32.mrf.mxu0
    %v1431 = vadd.f32 %v1142, %v1430
    %v1432 = vpop.f32.mrf.mxu0
    %1433 = vmatprep.mubr.bf16.mxu0 %v723
    %1434 = vmatmul.mubr.bf16.gmra.mxu0 %v722
    %v1435 = vpop.f32.mrf.mxu0
    %v1436 = vadd.f32 %v1147, %v1435
    %v1437 = vpop.f32.mrf.mxu0
    %v1438 = vpop.f32.mrf.mxu0
    %v1439 = vadd.f32 %v1150, %v1438
    %v1440 = vpop.f32.mrf.mxu0
    %1441 = vmatprep.mubr.bf16.mxu0 %v727
    %1442 = vmatmul.mubr.bf16.gmra.mxu0 %v726
    %v1443 = vpop.f32.mrf.mxu0
    %v1444 = vadd.f32 %v1155, %v1443
    %v1445 = vpop.f32.mrf.mxu0
    %v1446 = vpop.f32.mrf.mxu0
    %v1447 = vadd.f32 %v1158, %v1446
    %v1448 = vpop.f32.mrf.mxu0
    %1449 = vmatprep.mubr.bf16.mxu0 %v731
    %1450 = vmatmul.mubr.bf16.gmra.mxu0 %v730
    %v1451 = vpop.f32.mrf.mxu0
    %v1452 = vadd.f32 %v1163, %v1451
    %v1453 = vpop.f32.mrf.mxu0
    %v1454 = vpop.f32.mrf.mxu0
    %v1455 = vadd.f32 %v1166, %v1454
    %v1456 = vpop.f32.mrf.mxu0
    %1457 = vmatprep.mubr.bf16.mxu0 %v735
    %1458 = vmatmul.mubr.bf16.gmra.mxu0 %v734
    %v1459 = vpop.f32.mrf.mxu0
    %v1460 = vadd.f32 %v1171, %v1459
    %v1461 = vpop.f32.mrf.mxu0
    %v1462 = vpop.f32.mrf.mxu0
    %v1463 = vadd.f32 %v1174, %v1462
    %v1464 = vpop.f32.mrf.mxu0
    %1465 = vmatprep.mubr.bf16.mxu0 %v739
    %1466 = vmatmul.mubr.bf16.gmra.mxu0 %v738
    %v1467 = vpop.f32.mrf.mxu0
    %v1468 = vadd.f32 %v1179, %v1467
    %v1469 = vpop.f32.mrf.mxu0
    %v1470 = vpop.f32.mrf.mxu0
    %v1471 = vadd.f32 %v1182, %v1470
    %v1472 = vpop.f32.mrf.mxu0
    %1473 = vmatprep.mubr.bf16.mxu0 %v743
    %1474 = vmatmul.mubr.bf16.gmra.mxu0 %v742
    %v1475 = vpop.f32.mrf.mxu0
    %v1476 = vadd.f32 %v1187, %v1475
    %v1477 = vpop.f32.mrf.mxu0
    %v1478 = vpop.f32.mrf.mxu0
    %v1479 = vadd.f32 %v1190, %v1478
    %v1480 = vpop.f32.mrf.mxu0
    %1481 = vmatprep.mubr.bf16.mxu0 %v747
    %1482 = vmatmul.mubr.bf16.gmra.mxu0 %v746
    %v1483 = vpop.f32.mrf.mxu0
    %v1484 = vadd.f32 %v1195, %v1483
    %v1485 = vpop.f32.mrf.mxu0
    %v1486 = vpop.f32.mrf.mxu0
    %v1487 = vadd.f32 %v1198, %v1486
    %v1488 = vpop.f32.mrf.mxu0
    %1489 = vmatprep.mubr.bf16.mxu0 %v751
    %1490 = vmatmul.mubr.bf16.gmra.mxu0 %v750
    %v1491 = vpop.f32.mrf.mxu0
    %v1492 = vadd.f32 %v1203, %v1491
    %v1493 = vpop.f32.mrf.mxu0
    %v1494 = vpop.f32.mrf.mxu0
    %v1495 = vadd.f32 %v1206, %v1494
    %v1496 = vpop.f32.mrf.mxu0
    %1497 = vmatprep.mubr.bf16.mxu0 %v755
    %1498 = vmatmul.mubr.bf16.gmra.mxu0 %v754
    %v1499 = vpop.f32.mrf.mxu0
    %v1500 = vadd.f32 %v1211, %v1499
    %v1501 = vpop.f32.mrf.mxu0
    %v1502 = vpop.f32.mrf.mxu0
    %v1503 = vadd.f32 %v1214, %v1502
    %v1504 = vpop.f32.mrf.mxu0
    %1505 = vmatprep.mubr.bf16.mxu0 %v759
    %1506 = vmatmul.mubr.bf16.gmra.mxu0 %v758
    %v1507 = vpop.f32.mrf.mxu0
    %v1508 = vadd.f32 %v1219, %v1507
    %v1509 = vpop.f32.mrf.mxu0
    %v1510 = vpop.f32.mrf.mxu0
    %v1511 = vadd.f32 %v1222, %v1510
    %v1512 = vpop.f32.mrf.mxu0
    %1513 = vmatprep.mubr.bf16.mxu0 %v763
    %1514 = vmatmul.mubr.bf16.gmra.mxu0 %v762
    %v1515 = vpop.f32.mrf.mxu0
    %v1516 = vadd.f32 %v1227, %v1515
    %v1517 = vpop.f32.mrf.mxu0
    %v1518 = vpop.f32.mrf.mxu0
    %v1519 = vadd.f32 %v1230, %v1518
    %v1520 = vpop.f32.mrf.mxu0
    %1521 = vmatprep.mubr.bf16.mxu0 %v767
    %1522 = vmatmul.mubr.bf16.gmra.mxu0 %v766
    %v1523 = vpop.f32.mrf.mxu0
    %v1524 = vadd.f32 %v1235, %v1523
    %v1525 = vpop.f32.mrf.mxu0
    %v1526 = vpop.f32.mrf.mxu0
    %v1527 = vadd.f32 %v1238, %v1526
    %v1528 = vpop.f32.mrf.mxu0
    %1529 = vmatprep.mubr.bf16.mxu0 %v771
    %1530 = vmatmul.mubr.bf16.gmra.mxu0 %v770
    %v1531 = vpop.f32.mrf.mxu0
    %v1532 = vadd.f32 %v1243, %v1531
    %v1533 = vpop.f32.mrf.mxu0
    %v1534 = vpop.f32.mrf.mxu0
    %v1535 = vadd.f32 %v1246, %v1534
    %v1536 = vpop.f32.mrf.mxu0
    %1537 = vmatprep.mubr.bf16.mxu0 %v775
    %1538 = vmatmul.mubr.bf16.gmra.mxu0 %v774
    %v1539 = vpop.f32.mrf.mxu0
    %v1540 = vadd.f32 %v1251, %v1539
    %v1541 = vpop.f32.mrf.mxu0
    %v1542 = vpop.f32.mrf.mxu0
    %v1543 = vadd.f32 %v1254, %v1542
    %v1544 = vpop.f32.mrf.mxu0
    %1545 = vmatprep.mubr.bf16.mxu0 %v779
    %1546 = vmatmul.mubr.bf16.gmra.mxu0 %v778
    %v1547 = vpop.f32.mrf.mxu0
    %v1548 = vadd.f32 %v1259, %v1547
    %v1549 = vpop.f32.mrf.mxu0
    %v1550 = vpop.f32.mrf.mxu0
    %v1551 = vadd.f32 %v1262, %v1550
    %v1552 = vpop.f32.mrf.mxu0
    %1553 = vmatprep.mubr.bf16.mxu0 %v783
    %1554 = vmatmul.mubr.bf16.gmra.mxu0 %v782
    %v1555 = vpop.f32.mrf.mxu0
    %v1556 = vadd.f32 %v1267, %v1555
    %v1557 = vpop.f32.mrf.mxu0
    %v1558 = vpop.f32.mrf.mxu0
    %v1559 = vadd.f32 %v1270, %v1558
    %v1560 = vpop.f32.mrf.mxu0
    %1561 = vmatprep.mubr.bf16.mxu0 %v787
    %1562 = vmatmul.mubr.bf16.gmra.mxu0 %v786
    %v1563 = vpop.f32.mrf.mxu0
    %v1564 = vadd.f32 %v1275, %v1563
    %v1565 = vpop.f32.mrf.mxu0
    %v1566 = vpop.f32.mrf.mxu0
    %v1567 = vadd.f32 %v1278, %v1566
    %v1568 = vpop.f32.mrf.mxu0
    %1569 = vmatprep.mubr.bf16.mxu0 %v791
    %1570 = vmatmul.mubr.bf16.gmra.mxu0 %v790
    %v1571 = vpop.f32.mrf.mxu0
    %v1572 = vadd.f32 %v1283, %v1571
    %v1573 = vpop.f32.mrf.mxu0
    %v1574 = vpop.f32.mrf.mxu0
    %v1575 = vadd.f32 %v1286, %v1574
    %v1576 = vpop.f32.mrf.mxu0
    %1577 = vmatprep.mubr.bf16.mxu0 %v795
    %1578 = vmatmul.mubr.bf16.gmra.mxu0 %v794
    %v1579 = vpop.f32.mrf.mxu0
    %v1580 = vadd.f32 %v1291, %v1579
    %v1581 = vpop.f32.mrf.mxu0
    %v1582 = vpop.f32.mrf.mxu0
    %v1583 = vadd.f32 %v1294, %v1582
    %v1584 = vpop.f32.mrf.mxu0
    %1585 = vmatprep.mubr.bf16.mxu0 %v799
    %1586 = vmatmul.mubr.bf16.gmra.mxu0 %v798
    %v1587 = vpop.f32.mrf.mxu0
    %v1588 = vadd.f32 %v1299, %v1587
    %v1589 = vpop.f32.mrf.mxu0
    %v1590 = vpop.f32.mrf.mxu0
    %v1591 = vadd.f32 %v1302, %v1590
    %v1592 = vpop.f32.mrf.mxu0
    %1593 = vmatprep.mubr.bf16.mxu0 %v803
    %1594 = vmatmul.mubr.bf16.gmra.mxu0 %v802
    %v1595 = vpop.f32.mrf.mxu0
    %v1596 = vadd.f32 %v1307, %v1595
    %v1597 = vpop.f32.mrf.mxu0
    %v1598 = vpop.f32.mrf.mxu0
    %v1599 = vadd.f32 %v1310, %v1598
    %v1600 = vpop.f32.mrf.mxu0
    %1601 = vmatprep.mubr.bf16.mxu0 %v807
    %1602 = vmatmul.mubr.bf16.gmra.mxu0 %v806
    %v1603 = vpop.f32.mrf.mxu0
    %v1604 = vadd.f32 %v1315, %v1603
    %v1605 = vpop.f32.mrf.mxu0
    %v1606 = vpop.f32.mrf.mxu0
    %v1607 = vadd.f32 %v1318, %v1606
    %v1608 = vpop.f32.mrf.mxu0
    %1609 = vmatprep.mubr.bf16.mxu0 %v811
    %1610 = vmatmul.mubr.bf16.gmra.mxu0 %v810
    %v1611 = vpop.f32.mrf.mxu0
    %v1612 = vadd.f32 %v1323, %v1611
    %v1613 = vpop.f32.mrf.mxu0
    %v1614 = vpop.f32.mrf.mxu0
    %v1615 = vadd.f32 %v1326, %v1614
    %v1616 = vpop.f32.mrf.mxu0
    %1617 = vmatprep.mubr.bf16.mxu0 %v815
    %1618 = vmatmul.mubr.bf16.gmra.mxu0 %v814
    %v1619 = vpop.f32.mrf.mxu0
    %v1620 = vadd.f32 %v1331, %v1619
    %v1621 = vpop.f32.mrf.mxu0
    %v1622 = vpop.f32.mrf.mxu0
    %v1623 = vadd.f32 %v1334, %v1622
    %v1624 = vpop.f32.mrf.mxu0
    %1625 = vmatprep.mubr.bf16.mxu0 %v819
    %1626 = vmatmul.mubr.bf16.gmra.mxu0 %v818
    %v1627 = vpop.f32.mrf.mxu0
    %v1628 = vadd.f32 %v1339, %v1627
    %v1629 = vpop.f32.mrf.mxu0
    %v1630 = vpop.f32.mrf.mxu0
    %v1631 = vadd.f32 %v1342, %v1630
    %v1632 = vpop.f32.mrf.mxu0
    %1633 = vmatprep.mubr.bf16.mxu0 %v823
    %1634 = vmatmul.mubr.bf16.gmra.mxu0 %v822
    %v1635 = vpop.f32.mrf.mxu0
    %v1636 = vadd.f32 %v1347, %v1635
    %v1637 = vpop.f32.mrf.mxu0
    %v1638 = vpop.f32.mrf.mxu0
    %v1639 = vadd.f32 %v1350, %v1638
    %v1640 = vpop.f32.mrf.mxu0
    %1641 = vmatprep.mubr.bf16.mxu0 %v827
    %1642 = vmatmul.mubr.bf16.gmra.mxu0 %v826
    %v1643 = vpop.f32.mrf.mxu0
    %v1644 = vadd.f32 %v1355, %v1643
    %v1645 = vpop.f32.mrf.mxu0
    %v1646 = vpop.f32.mrf.mxu0
    %v1647 = vadd.f32 %v1358, %v1646
    %v1648 = vpop.f32.mrf.mxu0
    %1649 = vmatprep.mubr.bf16.mxu0 %v831
    %1650 = vmatmul.mubr.bf16.gmra.mxu0 %v830
    %v1651 = vpop.f32.mrf.mxu0
    %v1652 = vadd.f32 %v1363, %v1651
    %v1653 = vpop.f32.mrf.mxu0
    %v1654 = vpop.f32.mrf.mxu0
    %v1655 = vadd.f32 %v1366, %v1654
    %v1656 = vpop.f32.mrf.mxu0
    %1657 = vmatprep.mubr.bf16.mxu0 %v835
    %1658 = vmatmul.mubr.bf16.gmra.mxu0 %v834
    %v1659 = vpop.f32.mrf.mxu0
    %v1660 = vadd.f32 %v1371, %v1659
    %v1661 = vpop.f32.mrf.mxu0
    %v1662 = vpop.f32.mrf.mxu0
    %v1663 = vadd.f32 %v1374, %v1662
    %v1664 = vpop.f32.mrf.mxu0
    %1665 = vmatprep.mubr.bf16.mxu0 %v839
    %1666 = vmatmul.mubr.bf16.gmra.mxu0 %v838
    %v1667 = vpop.f32.mrf.mxu0
    %v1668 = vadd.f32 %v1379, %v1667
    %v1669 = vpop.f32.mrf.mxu0
    %v1670 = vpop.f32.mrf.mxu0
    %v1671 = vadd.f32 %v1382, %v1670
    %v1672 = vpop.f32.mrf.mxu0
    %1673 = vmatprep.mubr.bf16.mxu0 %v843
    %1674 = vmatmul.mubr.bf16.gmra.mxu0 %v842
    %v1675 = vpop.f32.mrf.mxu0
    %v1676 = vadd.f32 %v1387, %v1675
    %v1677 = vpop.f32.mrf.mxu0
    %v1678 = vpop.f32.mrf.mxu0
    %v1679 = vadd.f32 %v1390, %v1678
    %v1680 = vpop.f32.mrf.mxu0
    %1681 = vdwg.mxu0
    %v1682 = vadd.f32 %v652, %v1428
    %v1683 = vadd.f32 %v653, %v1431
    %v1684 = vadd.f32 %v654, %v1436
    %v1685 = vadd.f32 %v655, %v1439
    %v1686 = vadd.f32 %v656, %v1444
    %v1687 = vadd.f32 %v657, %v1447
    %v1688 = vadd.f32 %v658, %v1452
    %v1689 = vadd.f32 %v659, %v1455
    %v1690 = vadd.f32 %v660, %v1460
    %v1691 = vadd.f32 %v661, %v1463
    %v1692 = vadd.f32 %v662, %v1468
    %v1693 = vadd.f32 %v663, %v1471
    %v1694 = vadd.f32 %v664, %v1476
    %v1695 = vadd.f32 %v665, %v1479
    %v1696 = vadd.f32 %v666, %v1484
    %v1697 = vadd.f32 %v667, %v1487
    %v1698 = vadd.f32 %v668, %v1492
    %v1699 = vadd.f32 %v669, %v1495
    %v1700 = vadd.f32 %v670, %v1500
    %v1701 = vadd.f32 %v671, %v1503
    %v1702 = vadd.f32 %v672, %v1508
    %v1703 = vadd.f32 %v673, %v1511
    %v1704 = vadd.f32 %v674, %v1516
    %v1705 = vadd.f32 %v675, %v1519
    %v1706 = vadd.f32 %v676, %v1524
    %v1707 = vadd.f32 %v677, %v1527
    %v1708 = vadd.f32 %v678, %v1532
    %v1709 = vadd.f32 %v679, %v1535
    %v1710 = vadd.f32 %v680, %v1540
    %v1711 = vadd.f32 %v681, %v1543
    %v1712 = vadd.f32 %v682, %v1548
    %v1713 = vadd.f32 %v683, %v1551
    %v1714 = vadd.f32 %v684, %v1556
    %v1715 = vadd.f32 %v685, %v1559
    %v1716 = vadd.f32 %v686, %v1564
    %v1717 = vadd.f32 %v687, %v1567
    %v1718 = vadd.f32 %v688, %v1572
    %v1719 = vadd.f32 %v689, %v1575
    %v1720 = vadd.f32 %v690, %v1580
    %v1721 = vadd.f32 %v691, %v1583
    %v1722 = vadd.f32 %v692, %v1588
    %v1723 = vadd.f32 %v693, %v1591
    %v1724 = vadd.f32 %v694, %v1596
    %v1725 = vadd.f32 %v695, %v1599
    %v1726 = vadd.f32 %v696, %v1604
    %v1727 = vadd.f32 %v697, %v1607
    %v1728 = vadd.f32 %v698, %v1612
    %v1729 = vadd.f32 %v699, %v1615
    %v1730 = vadd.f32 %v700, %v1620
    %v1731 = vadd.f32 %v701, %v1623
    %v1732 = vadd.f32 %v702, %v1628
    %v1733 = vadd.f32 %v703, %v1631
    %v1734 = vadd.f32 %v704, %v1636
    %v1735 = vadd.f32 %v705, %v1639
    %v1736 = vadd.f32 %v706, %v1644
    %v1737 = vadd.f32 %v707, %v1647
    %v1738 = vadd.f32 %v708, %v1652
    %v1739 = vadd.f32 %v709, %v1655
    %v1740 = vadd.f32 %v710, %v1660
    %v1741 = vadd.f32 %v711, %v1663
    %v1742 = vadd.f32 %v712, %v1668
    %v1743 = vadd.f32 %v713, %v1671
    %v1744 = vadd.f32 %v714, %v1676
    %v1745 = vadd.f32 %v715, %v1679
    %1746 = vst [vmem:[#allocation2] sm:$0xff] %v1682
    %1747 = vst [vmem:[#allocation2 + $0x8] sm:$0xff] %v1683
    %1748 = vst [vmem:[#allocation2 + $0x10] sm:$0xff] %v1684
    %1749 = vst [vmem:[#allocation2 + $0x18] sm:$0xff] %v1685
    %1750 = vst [vmem:[#allocation2 + $0x20] sm:$0xff] %v1686
    %1751 = vst [vmem:[#allocation2 + $0x28] sm:$0xff] %v1687
    %1752 = vst [vmem:[#allocation2 + $0x30] sm:$0xff] %v1688
    %1753 = vst [vmem:[#allocation2 + $0x38] sm:$0xff] %v1689
    %1754 = vst [vmem:[#allocation2 + $0x40] sm:$0xff] %v1690
    %1755 = vst [vmem:[#allocation2 + $0x48] sm:$0xff] %v1691
    %1756 = vst [vmem:[#allocation2 + $0x50] sm:$0xff] %v1692
    %1757 = vst [vmem:[#allocation2 + $0x58] sm:$0xff] %v1693
    %1758 = vst [vmem:[#allocation2 + $0x60] sm:$0xff] %v1694
    %1759 = vst [vmem:[#allocation2 + $0x68] sm:$0xff] %v1695
    %1760 = vst [vmem:[#allocation2 + $0x70] sm:$0xff] %v1696
    %1761 = vst [vmem:[#allocation2 + $0x78] sm:$0xff] %v1697
    %1762 = vst [vmem:[#allocation2 + $0x80] sm:$0xff] %v1698
    %1763 = vst [vmem:[#allocation2 + $0x88] sm:$0xff] %v1699
    %1764 = vst [vmem:[#allocation2 + $0x90] sm:$0xff] %v1700
    %1765 = vst [vmem:[#allocation2 + $0x98] sm:$0xff] %v1701
    %1766 = vst [vmem:[#allocation2 + $0xa0] sm:$0xff] %v1702
    %1767 = vst [vmem:[#allocation2 + $0xa8] sm:$0xff] %v1703
    %1768 = vst [vmem:[#allocation2 + $0xb0] sm:$0xff] %v1704
    %1769 = vst [vmem:[#allocation2 + $0xb8] sm:$0xff] %v1705
    %1770 = vst [vmem:[#allocation2 + $0xc0] sm:$0xff] %v1706
    %1771 = vst [vmem:[#allocation2 + $0xc8] sm:$0xff] %v1707
    %1772 = vst [vmem:[#allocation2 + $0xd0] sm:$0xff] %v1708
    %1773 = vst [vmem:[#allocation2 + $0xd8] sm:$0xff] %v1709
    %1774 = vst [vmem:[#allocation2 + $0xe0] sm:$0xff] %v1710
    %1775 = vst [vmem:[#allocation2 + $0xe8] sm:$0xff] %v1711
    %1776 = vst [vmem:[#allocation2 + $0xf0] sm:$0xff] %v1712
    %1777 = vst [vmem:[#allocation2 + $0xf8] sm:$0xff] %v1713
    %1778 = vst [vmem:[#allocation2 + $0x100] sm:$0xff] %v1714
    %1779 = vst [vmem:[#allocation2 + $0x108] sm:$0xff] %v1715
    %1780 = vst [vmem:[#allocation2 + $0x110] sm:$0xff] %v1716
    %1781 = vst [vmem:[#allocation2 + $0x118] sm:$0xff] %v1717
    %1782 = vst [vmem:[#allocation2 + $0x120] sm:$0xff] %v1718
    %1783 = vst [vmem:[#allocation2 + $0x128] sm:$0xff] %v1719
    %1784 = vst [vmem:[#allocation2 + $0x130] sm:$0xff] %v1720
    %1785 = vst [vmem:[#allocation2 + $0x138] sm:$0xff] %v1721
    %1786 = vst [vmem:[#allocation2 + $0x140] sm:$0xff] %v1722
    %1787 = vst [vmem:[#allocation2 + $0x148] sm:$0xff] %v1723
    %1788 = vst [vmem:[#allocation2 + $0x150] sm:$0xff] %v1724
    %1789 = vst [vmem:[#allocation2 + $0x158] sm:$0xff] %v1725
    %1790 = vst [vmem:[#allocation2 + $0x160] sm:$0xff] %v1726
    %1791 = vst [vmem:[#allocation2 + $0x168] sm:$0xff] %v1727
    %1792 = vst [vmem:[#allocation2 + $0x170] sm:$0xff] %v1728
    %1793 = vst [vmem:[#allocation2 + $0x178] sm:$0xff] %v1729
    %1794 = vst [vmem:[#allocation2 + $0x180] sm:$0xff] %v1730
    %1795 = vst [vmem:[#allocation2 + $0x188] sm:$0xff] %v1731
    %1796 = vst [vmem:[#allocation2 + $0x190] sm:$0xff] %v1732
    %1797 = vst [vmem:[#allocation2 + $0x198] sm:$0xff] %v1733
    %1798 = vst [vmem:[#allocation2 + $0x1a0] sm:$0xff] %v1734
    %1799 = vst [vmem:[#allocation2 + $0x1a8] sm:$0xff] %v1735
    %1800 = vst [vmem:[#allocation2 + $0x1b0] sm:$0xff] %v1736
    %1801 = vst [vmem:[#allocation2 + $0x1b8] sm:$0xff] %v1737
    %1802 = vst [vmem:[#allocation2 + $0x1c0] sm:$0xff] %v1738
    %1803 = vst [vmem:[#allocation2 + $0x1c8] sm:$0xff] %v1739
    %1804 = vst [vmem:[#allocation2 + $0x1d0] sm:$0xff] %v1740
    %1805 = vst [vmem:[#allocation2 + $0x1d8] sm:$0xff] %v1741
    %1806 = vst [vmem:[#allocation2 + $0x1e0] sm:$0xff] %v1742
    %1807 = vst [vmem:[#allocation2 + $0x1e8] sm:$0xff] %v1743
    %1808 = vst [vmem:[#allocation2 + $0x1f0] sm:$0xff] %v1744
    %1809 = vst [vmem:[#allocation2 + $0x1f8] sm:$0xff] %v1745
    // Predicated region
    $region34: #{tpu_custom_call.1} parent=1 // pred_check
      %p1810 = pneg %p60
    $region35: #{tpu_custom_call.1} parent=1 // pred_check_branch
      %1812 = sbr.rel (%p1810) target = $region37
    $region36: #{tpu_custom_call.1} parent=1 // pred_region
      %v1813 = vld [vmem:[#allocation2] sm:$0xff]
      %v1814 = vld [vmem:[#allocation2 + $0x8] sm:$0xff]
      %v1815 = vld [vmem:[#allocation2 + $0x10] sm:$0xff]
      %v1816 = vld [vmem:[#allocation2 + $0x18] sm:$0xff]
      %v1817 = vld [vmem:[#allocation2 + $0x20] sm:$0xff]
      %v1818 = vld [vmem:[#allocation2 + $0x28] sm:$0xff]
      %v1819 = vld [vmem:[#allocation2 + $0x30] sm:$0xff]
      %v1820 = vld [vmem:[#allocation2 + $0x38] sm:$0xff]
      %v1821 = vld [vmem:[#allocation2 + $0x40] sm:$0xff]
      %v1822 = vld [vmem:[#allocation2 + $0x48] sm:$0xff]
      %v1823 = vld [vmem:[#allocation2 + $0x50] sm:$0xff]
      %v1824 = vld [vmem:[#allocation2 + $0x58] sm:$0xff]
      %v1825 = vld [vmem:[#allocation2 + $0x60] sm:$0xff]
      %v1826 = vld [vmem:[#allocation2 + $0x68] sm:$0xff]
      %v1827 = vld [vmem:[#allocation2 + $0x70] sm:$0xff]
      %v1828 = vld [vmem:[#allocation2 + $0x78] sm:$0xff]
      %v1829 = vld [vmem:[#allocation2 + $0x80] sm:$0xff]
      %v1830 = vld [vmem:[#allocation2 + $0x88] sm:$0xff]
      %v1831 = vld [vmem:[#allocation2 + $0x90] sm:$0xff]
      %v1832 = vld [vmem:[#allocation2 + $0x98] sm:$0xff]
      %v1833 = vld [vmem:[#allocation2 + $0xa0] sm:$0xff]
      %v1834 = vld [vmem:[#allocation2 + $0xa8] sm:$0xff]
      %v1835 = vld [vmem:[#allocation2 + $0xb0] sm:$0xff]
      %v1836 = vld [vmem:[#allocation2 + $0xb8] sm:$0xff]
      %v1837 = vld [vmem:[#allocation2 + $0xc0] sm:$0xff]
      %v1838 = vld [vmem:[#allocation2 + $0xc8] sm:$0xff]
      %v1839 = vld [vmem:[#allocation2 + $0xd0] sm:$0xff]
      %v1840 = vld [vmem:[#allocation2 + $0xd8] sm:$0xff]
      %v1841 = vld [vmem:[#allocation2 + $0xe0] sm:$0xff]
      %v1842 = vld [vmem:[#allocation2 + $0xe8] sm:$0xff]
      %v1843 = vld [vmem:[#allocation2 + $0xf0] sm:$0xff]
      %v1844 = vld [vmem:[#allocation2 + $0xf8] sm:$0xff]
      %v1845 = vld [vmem:[#allocation2 + $0x100] sm:$0xff]
      %v1846 = vld [vmem:[#allocation2 + $0x108] sm:$0xff]
      %v1847 = vld [vmem:[#allocation2 + $0x110] sm:$0xff]
      %v1848 = vld [vmem:[#allocation2 + $0x118] sm:$0xff]
      %v1849 = vld [vmem:[#allocation2 + $0x120] sm:$0xff]
      %v1850 = vld [vmem:[#allocation2 + $0x128] sm:$0xff]
      %v1851 = vld [vmem:[#allocation2 + $0x130] sm:$0xff]
      %v1852 = vld [vmem:[#allocation2 + $0x138] sm:$0xff]
      %v1853 = vld [vmem:[#allocation2 + $0x140] sm:$0xff]
      %v1854 = vld [vmem:[#allocation2 + $0x148] sm:$0xff]
      %v1855 = vld [vmem:[#allocation2 + $0x150] sm:$0xff]
      %v1856 = vld [vmem:[#allocation2 + $0x158] sm:$0xff]
      %v1857 = vld [vmem:[#allocation2 + $0x160] sm:$0xff]
      %v1858 = vld [vmem:[#allocation2 + $0x168] sm:$0xff]
      %v1859 = vld [vmem:[#allocation2 + $0x170] sm:$0xff]
      %v1860 = vld [vmem:[#allocation2 + $0x178] sm:$0xff]
      %v1861 = vld [vmem:[#allocation2 + $0x180] sm:$0xff]
      %v1862 = vld [vmem:[#allocation2 + $0x188] sm:$0xff]
      %v1863 = vld [vmem:[#allocation2 + $0x190] sm:$0xff]
      %v1864 = vld [vmem:[#allocation2 + $0x198] sm:$0xff]
      %v1865 = vld [vmem:[#allocation2 + $0x1a0] sm:$0xff]
      %v1866 = vld [vmem:[#allocation2 + $0x1a8] sm:$0xff]
      %v1867 = vld [vmem:[#allocation2 + $0x1b0] sm:$0xff]
      %v1868 = vld [vmem:[#allocation2 + $0x1b8] sm:$0xff]
      %v1869 = vld [vmem:[#allocation2 + $0x1c0] sm:$0xff]
      %v1870 = vld [vmem:[#allocation2 + $0x1c8] sm:$0xff]
      %v1871 = vld [vmem:[#allocation2 + $0x1d0] sm:$0xff]
      %v1872 = vld [vmem:[#allocation2 + $0x1d8] sm:$0xff]
      %v1873 = vld [vmem:[#allocation2 + $0x1e0] sm:$0xff]
      %v1874 = vld [vmem:[#allocation2 + $0x1e8] sm:$0xff]
      %v1875 = vld [vmem:[#allocation2 + $0x1f0] sm:$0xff]
      %v1876 = vld [vmem:[#allocation2 + $0x1f8] sm:$0xff]
      %v1877 = vld [vmem:[%s2] sm:$0x1]
      %v1879 = vlaneseq
      %v1880 = vshrl.u32 %v1879, 7
      %v1881 = vsub.s32 0, %v1880
      %v1882 = vrot.slane %v1877, %v1881
      %v1884 = vadd.f32 %v1813, %v1882
      %v1885 = vadd.f32 %v1814, %v1882
      %v1886 = vadd.f32 %v1815, %v1882
      %v1887 = vadd.f32 %v1816, %v1882
      %v1888 = vadd.f32 %v1817, %v1882
      %v1889 = vadd.f32 %v1818, %v1882
      %v1890 = vadd.f32 %v1819, %v1882
      %v1891 = vadd.f32 %v1820, %v1882
      %v1892 = vadd.f32 %v1821, %v1882
      %v1893 = vadd.f32 %v1822, %v1882
      %v1894 = vadd.f32 %v1823, %v1882
      %v1895 = vadd.f32 %v1824, %v1882
      %v1896 = vadd.f32 %v1825, %v1882
      %v1897 = vadd.f32 %v1826, %v1882
      %v1898 = vadd.f32 %v1827, %v1882
      %v1899 = vadd.f32 %v1828, %v1882
      %v1900 = vadd.f32 %v1829, %v1882
      %v1901 = vadd.f32 %v1830, %v1882
      %v1902 = vadd.f32 %v1831, %v1882
      %v1903 = vadd.f32 %v1832, %v1882
      %v1904 = vadd.f32 %v1833, %v1882
      %v1905 = vadd.f32 %v1834, %v1882
      %v1906 = vadd.f32 %v1835, %v1882
      %v1907 = vadd.f32 %v1836, %v1882
      %v1908 = vadd.f32 %v1837, %v1882
      %v1909 = vadd.f32 %v1838, %v1882
      %v1910 = vadd.f32 %v1839, %v1882
      %v1911 = vadd.f32 %v1840, %v1882
      %v1912 = vadd.f32 %v1841, %v1882
      %v1913 = vadd.f32 %v1842, %v1882
      %v1914 = vadd.f32 %v1843, %v1882
      %v1915 = vadd.f32 %v1844, %v1882
      %v1916 = vadd.f32 %v1845, %v1882
      %v1917 = vadd.f32 %v1846, %v1882
      %v1918 = vadd.f32 %v1847, %v1882
      %v1919 = vadd.f32 %v1848, %v1882
      %v1920 = vadd.f32 %v1849, %v1882
      %v1921 = vadd.f32 %v1850, %v1882
      %v1922 = vadd.f32 %v1851, %v1882
      %v1923 = vadd.f32 %v1852, %v1882
      %v1924 = vadd.f32 %v1853, %v1882
      %v1925 = vadd.f32 %v1854, %v1882
      %v1926 = vadd.f32 %v1855, %v1882
      %v1927 = vadd.f32 %v1856, %v1882
      %v1928 = vadd.f32 %v1857, %v1882
      %v1929 = vadd.f32 %v1858, %v1882
      %v1930 = vadd.f32 %v1859, %v1882
      %v1931 = vadd.f32 %v1860, %v1882
      %v1932 = vadd.f32 %v1861, %v1882
      %v1933 = vadd.f32 %v1862, %v1882
      %v1934 = vadd.f32 %v1863, %v1882
      %v1935 = vadd.f32 %v1864, %v1882
      %v1936 = vadd.f32 %v1865, %v1882
      %v1937 = vadd.f32 %v1866, %v1882
      %v1938 = vadd.f32 %v1867, %v1882
      %v1939 = vadd.f32 %v1868, %v1882
      %v1940 = vadd.f32 %v1869, %v1882
      %v1941 = vadd.f32 %v1870, %v1882
      %v1942 = vadd.f32 %v1871, %v1882
      %v1943 = vadd.f32 %v1872, %v1882
      %v1944 = vadd.f32 %v1873, %v1882
      %v1945 = vadd.f32 %v1874, %v1882
      %v1946 = vadd.f32 %v1875, %v1882
      %v1947 = vadd.f32 %v1876, %v1882
      %v1948 = vmax.f32 %v1884, 0.0
      %v1949 = vmax.f32 %v1885, 0.0
      %v1950 = vmax.f32 %v1886, 0.0
      %v1951 = vmax.f32 %v1887, 0.0
      %v1952 = vmax.f32 %v1888, 0.0
      %v1953 = vmax.f32 %v1889, 0.0
      %v1954 = vmax.f32 %v1890, 0.0
      %v1955 = vmax.f32 %v1891, 0.0
      %v1956 = vmax.f32 %v1892, 0.0
      %v1957 = vmax.f32 %v1893, 0.0
      %v1958 = vmax.f32 %v1894, 0.0
      %v1959 = vmax.f32 %v1895, 0.0
      %v1960 = vmax.f32 %v1896, 0.0
      %v1961 = vmax.f32 %v1897, 0.0
      %v1962 = vmax.f32 %v1898, 0.0
      %v1963 = vmax.f32 %v1899, 0.0
      %v1964 = vmax.f32 %v1900, 0.0
      %v1965 = vmax.f32 %v1901, 0.0
      %v1966 = vmax.f32 %v1902, 0.0
      %v1967 = vmax.f32 %v1903, 0.0
      %v1968 = vmax.f32 %v1904, 0.0
      %v1969 = vmax.f32 %v1905, 0.0
      %v1970 = vmax.f32 %v1906, 0.0
      %v1971 = vmax.f32 %v1907, 0.0
      %v1972 = vmax.f32 %v1908, 0.0
      %v1973 = vmax.f32 %v1909, 0.0
      %v1974 = vmax.f32 %v1910, 0.0
      %v1975 = vmax.f32 %v1911, 0.0
      %v1976 = vmax.f32 %v1912, 0.0
      %v1977 = vmax.f32 %v1913, 0.0
      %v1978 = vmax.f32 %v1914, 0.0
      %v1979 = vmax.f32 %v1915, 0.0
      %v1980 = vmax.f32 %v1916, 0.0
      %v1981 = vmax.f32 %v1917, 0.0
      %v1982 = vmax.f32 %v1918, 0.0
      %v1983 = vmax.f32 %v1919, 0.0
      %v1984 = vmax.f32 %v1920, 0.0
      %v1985 = vmax.f32 %v1921, 0.0
      %v1986 = vmax.f32 %v1922, 0.0
      %v1987 = vmax.f32 %v1923, 0.0
      %v1988 = vmax.f32 %v1924, 0.0
      %v1989 = vmax.f32 %v1925, 0.0
      %v1990 = vmax.f32 %v1926, 0.0
      %v1991 = vmax.f32 %v1927, 0.0
      %v1992 = vmax.f32 %v1928, 0.0
      %v1993 = vmax.f32 %v1929, 0.0
      %v1994 = vmax.f32 %v1930, 0.0
      %v1995 = vmax.f32 %v1931, 0.0
      %v1996 = vmax.f32 %v1932, 0.0
      %v1997 = vmax.f32 %v1933, 0.0
      %v1998 = vmax.f32 %v1934, 0.0
      %v1999 = vmax.f32 %v1935, 0.0
      %v2000 = vmax.f32 %v1936, 0.0
      %v2001 = vmax.f32 %v1937, 0.0
      %v2002 = vmax.f32 %v1938, 0.0
      %v2003 = vmax.f32 %v1939, 0.0
      %v2004 = vmax.f32 %v1940, 0.0
      %v2005 = vmax.f32 %v1941, 0.0
      %v2006 = vmax.f32 %v1942, 0.0
      %v2007 = vmax.f32 %v1943, 0.0
      %v2008 = vmax.f32 %v1944, 0.0
      %v2009 = vmax.f32 %v1945, 0.0
      %v2010 = vmax.f32 %v1946, 0.0
      %v2011 = vmax.f32 %v1947, 0.0
      %v2012 = vpack.c.bf16 %v1949, %v1948
      %v2013 = vpack.c.bf16 %v1951, %v1950
      %v2014 = vpack.c.bf16 %v1953, %v1952
      %v2015 = vpack.c.bf16 %v1955, %v1954
      %v2016 = vpack.c.bf16 %v1957, %v1956
      %v2017 = vpack.c.bf16 %v1959, %v1958
      %v2018 = vpack.c.bf16 %v1961, %v1960
      %v2019 = vpack.c.bf16 %v1963, %v1962
      %v2020 = vpack.c.bf16 %v1965, %v1964
      %v2021 = vpack.c.bf16 %v1967, %v1966
      %v2022 = vpack.c.bf16 %v1969, %v1968
      %v2023 = vpack.c.bf16 %v1971, %v1970
      %v2024 = vpack.c.bf16 %v1973, %v1972
      %v2025 = vpack.c.bf16 %v1975, %v1974
      %v2026 = vpack.c.bf16 %v1977, %v1976
      %v2027 = vpack.c.bf16 %v1979, %v1978
      %v2028 = vpack.c.bf16 %v1981, %v1980
      %v2029 = vpack.c.bf16 %v1983, %v1982
      %v2030 = vpack.c.bf16 %v1985, %v1984
      %v2031 = vpack.c.bf16 %v1987, %v1986
      %v2032 = vpack.c.bf16 %v1989, %v1988
      %v2033 = vpack.c.bf16 %v1991, %v1990
      %v2034 = vpack.c.bf16 %v1993, %v1992
      %v2035 = vpack.c.bf16 %v1995, %v1994
      %v2036 = vpack.c.bf16 %v1997, %v1996
      %v2037 = vpack.c.bf16 %v1999, %v1998
      %v2038 = vpack.c.bf16 %v2001, %v2000
      %v2039 = vpack.c.bf16 %v2003, %v2002
      %v2040 = vpack.c.bf16 %v2005, %v2004
      %v2041 = vpack.c.bf16 %v2007, %v2006
      %v2042 = vpack.c.bf16 %v2009, %v2008
      %v2043 = vpack.c.bf16 %v2011, %v2010
      %v2044 = vld [vmem:[#allocation8] sm:$0xf]
      %v2045 = vld [vmem:[#allocation8 + $0x4] sm:$0xf]
      %v2046 = vld [vmem:[#allocation8 + $0x8] sm:$0xf]
      %v2047 = vld [vmem:[#allocation8 + $0xc] sm:$0xf]
      %v2048 = vld [vmem:[#allocation8 + $0x10] sm:$0xf]
      %v2049 = vld [vmem:[#allocation8 + $0x14] sm:$0xf]
      %v2050 = vld [vmem:[#allocation8 + $0x18] sm:$0xf]
      %v2051 = vld [vmem:[#allocation8 + $0x1c] sm:$0xf]
      %v2052 = vld [vmem:[#allocation8 + $0x20] sm:$0xf]
      %v2053 = vld [vmem:[#allocation8 + $0x24] sm:$0xf]
      %v2054 = vld [vmem:[#allocation8 + $0x28] sm:$0xf]
      %v2055 = vld [vmem:[#allocation8 + $0x2c] sm:$0xf]
      %v2056 = vld [vmem:[#allocation8 + $0x30] sm:$0xf]
      %v2057 = vld [vmem:[#allocation8 + $0x34] sm:$0xf]
      %v2058 = vld [vmem:[#allocation8 + $0x38] sm:$0xf]
      %v2059 = vld [vmem:[#allocation8 + $0x3c] sm:$0xf]
      %v2076 = vunpack.c.l.b16 %v2044
      %v2077 = vunpack.c.l.b16 %v2045
      %v2078 = vunpack.c.l.b16 %v2046
      %v2079 = vunpack.c.l.b16 %v2047
      %v2080 = vunpack.c.l.b16 %v2048
      %v2081 = vunpack.c.l.b16 %v2049
      %v2082 = vunpack.c.l.b16 %v2050
      %v2083 = vunpack.c.l.b16 %v2051
      %v2084 = vunpack.c.l.b16 %v2052
      %v2085 = vunpack.c.l.b16 %v2053
      %v2086 = vunpack.c.l.b16 %v2054
      %v2087 = vunpack.c.l.b16 %v2055
      %v2088 = vunpack.c.l.b16 %v2056
      %v2089 = vunpack.c.l.b16 %v2057
      %v2090 = vunpack.c.l.b16 %v2058
      %v2091 = vunpack.c.l.b16 %v2059
      %v2092 = vpack.c.b16 %v2077, %v2076
      %v2093 = vpack.c.b16 %v2079, %v2078
      %v2094 = vpack.c.b16 %v2081, %v2080
      %v2095 = vpack.c.b16 %v2083, %v2082
      %v2096 = vpack.c.b16 %v2085, %v2084
      %v2097 = vpack.c.b16 %v2087, %v2086
      %v2098 = vpack.c.b16 %v2089, %v2088
      %v2099 = vpack.c.b16 %v2091, %v2090
      %2108 = vmatprep.subr.bf16.mxu0 0
      %2109 = vmatpush1.bf16.msra.mxu0 %v2099
      %2110 = vmatprep.subr.bf16.mxu0 0
      %2111 = vmatpush1.bf16.msra.mxu0 %v2098
      %2112 = vmatprep.subr.bf16.mxu0 0
      %2113 = vmatpush1.bf16.msra.mxu0 %v2097
      %2114 = vmatprep.subr.bf16.mxu0 0
      %2115 = vmatpush1.bf16.msra.mxu0 %v2096
      %2116 = vmatprep.subr.bf16.mxu0 0
      %2117 = vmatpush1.bf16.msra.mxu0 %v2095
      %2118 = vmatprep.subr.bf16.mxu0 0
      %2119 = vmatpush1.bf16.msra.mxu0 %v2094
      %2120 = vmatprep.subr.bf16.mxu0 0
      %2121 = vmatpush1.bf16.msra.mxu0 %v2093
      %2122 = vmatprep.subr.bf16.mxu0 0
      %2123 = vmatpush1.bf16.msra.mxu0 %v2092
      %2124 = vmatprep.subr.bf16.mxu0 0
      %2125 = vmatpush2.bf16.msra.mxu0 0
      %2126 = vmatprep.subr.bf16.mxu0 0
      %2127 = vmatpush2.bf16.msra.mxu0 0
      %2128 = vmatprep.subr.bf16.mxu0 0
      %2129 = vmatpush2.bf16.msra.mxu0 0
      %2130 = vmatprep.subr.bf16.mxu0 0
      %2131 = vmatpush2.bf16.msra.mxu0 0
      %2132 = vmatprep.subr.bf16.mxu0 0
      %2133 = vmatpush2.bf16.msra.mxu0 0
      %2134 = vmatprep.subr.bf16.mxu0 0
      %2135 = vmatpush2.bf16.msra.mxu0 0
      %2136 = vmatprep.subr.bf16.mxu0 0
      %2137 = vmatpush2.bf16.msra.mxu0 0
      %2138 = vmatprep.subr.bf16.mxu0 0
      %2139 = vmatpush2.bf16.msra.mxu0 0
      %2140 = vmatprep.mubr.bf16.mxu0 0
      %2141 = vmatmul.mubr.bf16.gmra.mxu0 %v2012
      %v2142 = vpop.f32.mrf.mxu0
      %v2143 = vadd.f32 0.0, %v2142
      %v2144 = vpop.f32.mrf.mxu0
      %v2145 = vpop.f32.mrf.mxu0
      %v2146 = vadd.f32 0.0, %v2145
      %v2147 = vpop.f32.mrf.mxu0
      %2148 = vmatprep.mubr.bf16.mxu0 0
      %2149 = vmatmul.mubr.bf16.gmra.mxu0 %v2013
      %v2150 = vpop.f32.mrf.mxu0
      %v2151 = vadd.f32 0.0, %v2150
      %v2152 = vpop.f32.mrf.mxu0
      %v2153 = vpop.f32.mrf.mxu0
      %v2154 = vadd.f32 0.0, %v2153
      %v2155 = vpop.f32.mrf.mxu0
      %2156 = vmatprep.mubr.bf16.mxu0 0
      %2157 = vmatmul.mubr.bf16.gmra.mxu0 %v2014
      %v2158 = vpop.f32.mrf.mxu0
      %v2159 = vadd.f32 0.0, %v2158
      %v2160 = vpop.f32.mrf.mxu0
      %v2161 = vpop.f32.mrf.mxu0
      %v2162 = vadd.f32 0.0, %v2161
      %v2163 = vpop.f32.mrf.mxu0
      %2164 = vmatprep.mubr.bf16.mxu0 0
      %2165 = vmatmul.mubr.bf16.gmra.mxu0 %v2015
      %v2166 = vpop.f32.mrf.mxu0
      %v2167 = vadd.f32 0.0, %v2166
      %v2168 = vpop.f32.mrf.mxu0
      %v2169 = vpop.f32.mrf.mxu0
      %v2170 = vadd.f32 0.0, %v2169
      %v2171 = vpop.f32.mrf.mxu0
      %2172 = vmatprep.mubr.bf16.mxu0 0
      %2173 = vmatmul.mubr.bf16.gmra.mxu0 %v2016
      %v2174 = vpop.f32.mrf.mxu0
      %v2175 = vadd.f32 0.0, %v2174
      %v2176 = vpop.f32.mrf.mxu0
      %v2177 = vpop.f32.mrf.mxu0
      %v2178 = vadd.f32 0.0, %v2177
      %v2179 = vpop.f32.mrf.mxu0
      %2180 = vmatprep.mubr.bf16.mxu0 0
      %2181 = vmatmul.mubr.bf16.gmra.mxu0 %v2017
      %v2182 = vpop.f32.mrf.mxu0
      %v2183 = vadd.f32 0.0, %v2182
      %v2184 = vpop.f32.mrf.mxu0
      %v2185 = vpop.f32.mrf.mxu0
      %v2186 = vadd.f32 0.0, %v2185
      %v2187 = vpop.f32.mrf.mxu0
      %2188 = vmatprep.mubr.bf16.mxu0 0
      %2189 = vmatmul.mubr.bf16.gmra.mxu0 %v2018
      %v2190 = vpop.f32.mrf.mxu0
      %v2191 = vadd.f32 0.0, %v2190
      %v2192 = vpop.f32.mrf.mxu0
      %v2193 = vpop.f32.mrf.mxu0
      %v2194 = vadd.f32 0.0, %v2193
      %v2195 = vpop.f32.mrf.mxu0
      %2196 = vmatprep.mubr.bf16.mxu0 0
      %2197 = vmatmul.mubr.bf16.gmra.mxu0 %v2019
      %v2198 = vpop.f32.mrf.mxu0
      %v2199 = vadd.f32 0.0, %v2198
      %v2200 = vpop.f32.mrf.mxu0
      %v2201 = vpop.f32.mrf.mxu0
      %v2202 = vadd.f32 0.0, %v2201
      %v2203 = vpop.f32.mrf.mxu0
      %2204 = vmatprep.mubr.bf16.mxu0 0
      %2205 = vmatmul.mubr.bf16.gmra.mxu0 %v2020
      %v2206 = vpop.f32.mrf.mxu0
      %v2207 = vadd.f32 0.0, %v2206
      %v2208 = vpop.f32.mrf.mxu0
      %v2209 = vpop.f32.mrf.mxu0
      %v2210 = vadd.f32 0.0, %v2209
      %v2211 = vpop.f32.mrf.mxu0
      %2212 = vmatprep.mubr.bf16.mxu0 0
      %2213 = vmatmul.mubr.bf16.gmra.mxu0 %v2021
      %v2214 = vpop.f32.mrf.mxu0
      %v2215 = vadd.f32 0.0, %v2214
      %v2216 = vpop.f32.mrf.mxu0
      %v2217 = vpop.f32.mrf.mxu0
      %v2218 = vadd.f32 0.0, %v2217
      %v2219 = vpop.f32.mrf.mxu0
      %2220 = vmatprep.mubr.bf16.mxu0 0
      %2221 = vmatmul.mubr.bf16.gmra.mxu0 %v2022
      %v2222 = vpop.f32.mrf.mxu0
      %v2223 = vadd.f32 0.0, %v2222
      %v2224 = vpop.f32.mrf.mxu0
      %v2225 = vpop.f32.mrf.mxu0
      %v2226 = vadd.f32 0.0, %v2225
      %v2227 = vpop.f32.mrf.mxu0
      %2228 = vmatprep.mubr.bf16.mxu0 0
      %2229 = vmatmul.mubr.bf16.gmra.mxu0 %v2023
      %v2230 = vpop.f32.mrf.mxu0
      %v2231 = vadd.f32 0.0, %v2230
      %v2232 = vpop.f32.mrf.mxu0
      %v2233 = vpop.f32.mrf.mxu0
      %v2234 = vadd.f32 0.0, %v2233
      %v2235 = vpop.f32.mrf.mxu0
      %2236 = vmatprep.mubr.bf16.mxu0 0
      %2237 = vmatmul.mubr.bf16.gmra.mxu0 %v2024
      %v2238 = vpop.f32.mrf.mxu0
      %v2239 = vadd.f32 0.0, %v2238
      %v2240 = vpop.f32.mrf.mxu0
      %v2241 = vpop.f32.mrf.mxu0
      %v2242 = vadd.f32 0.0, %v2241
      %v2243 = vpop.f32.mrf.mxu0
      %2244 = vmatprep.mubr.bf16.mxu0 0
      %2245 = vmatmul.mubr.bf16.gmra.mxu0 %v2025
      %v2246 = vpop.f32.mrf.mxu0
      %v2247 = vadd.f32 0.0, %v2246
      %v2248 = vpop.f32.mrf.mxu0
      %v2249 = vpop.f32.mrf.mxu0
      %v2250 = vadd.f32 0.0, %v2249
      %v2251 = vpop.f32.mrf.mxu0
      %2252 = vmatprep.mubr.bf16.mxu0 0
      %2253 = vmatmul.mubr.bf16.gmra.mxu0 %v2026
      %v2254 = vpop.f32.mrf.mxu0
      %v2255 = vadd.f32 0.0, %v2254
      %v2256 = vpop.f32.mrf.mxu0
      %v2257 = vpop.f32.mrf.mxu0
      %v2258 = vadd.f32 0.0, %v2257
      %v2259 = vpop.f32.mrf.mxu0
      %2260 = vmatprep.mubr.bf16.mxu0 0
      %2261 = vmatmul.mubr.bf16.gmra.mxu0 %v2027
      %v2262 = vpop.f32.mrf.mxu0
      %v2263 = vadd.f32 0.0, %v2262
      %v2264 = vpop.f32.mrf.mxu0
      %v2265 = vpop.f32.mrf.mxu0
      %v2266 = vadd.f32 0.0, %v2265
      %v2267 = vpop.f32.mrf.mxu0
      %2268 = vmatprep.mubr.bf16.mxu0 0
      %2269 = vmatmul.mubr.bf16.gmra.mxu0 %v2028
      %v2270 = vpop.f32.mrf.mxu0
      %v2271 = vadd.f32 0.0, %v2270
      %v2272 = vpop.f32.mrf.mxu0
      %v2273 = vpop.f32.mrf.mxu0
      %v2274 = vadd.f32 0.0, %v2273
      %v2275 = vpop.f32.mrf.mxu0
      %2276 = vmatprep.mubr.bf16.mxu0 0
      %2277 = vmatmul.mubr.bf16.gmra.mxu0 %v2029
      %v2278 = vpop.f32.mrf.mxu0
      %v2279 = vadd.f32 0.0, %v2278
      %v2280 = vpop.f32.mrf.mxu0
      %v2281 = vpop.f32.mrf.mxu0
      %v2282 = vadd.f32 0.0, %v2281
      %v2283 = vpop.f32.mrf.mxu0
      %2284 = vmatprep.mubr.bf16.mxu0 0
      %2285 = vmatmul.mubr.bf16.gmra.mxu0 %v2030
      %v2286 = vpop.f32.mrf.mxu0
      %v2287 = vadd.f32 0.0, %v2286
      %v2288 = vpop.f32.mrf.mxu0
      %v2289 = vpop.f32.mrf.mxu0
      %v2290 = vadd.f32 0.0, %v2289
      %v2291 = vpop.f32.mrf.mxu0
      %2292 = vmatprep.mubr.bf16.mxu0 0
      %2293 = vmatmul.mubr.bf16.gmra.mxu0 %v2031
      %v2294 = vpop.f32.mrf.mxu0
      %v2295 = vadd.f32 0.0, %v2294
      %v2296 = vpop.f32.mrf.mxu0
      %v2297 = vpop.f32.mrf.mxu0
      %v2298 = vadd.f32 0.0, %v2297
      %v2299 = vpop.f32.mrf.mxu0
      %2300 = vmatprep.mubr.bf16.mxu0 0
      %2301 = vmatmul.mubr.bf16.gmra.mxu0 %v2032
      %v2302 = vpop.f32.mrf.mxu0
      %v2303 = vadd.f32 0.0, %v2302
      %v2304 = vpop.f32.mrf.mxu0
      %v2305 = vpop.f32.mrf.mxu0
      %v2306 = vadd.f32 0.0, %v2305
      %v2307 = vpop.f32.mrf.mxu0
      %2308 = vmatprep.mubr.bf16.mxu0 0
      %2309 = vmatmul.mubr.bf16.gmra.mxu0 %v2033
      %v2310 = vpop.f32.mrf.mxu0
      %v2311 = vadd.f32 0.0, %v2310
      %v2312 = vpop.f32.mrf.mxu0
      %v2313 = vpop.f32.mrf.mxu0
      %v2314 = vadd.f32 0.0, %v2313
      %v2315 = vpop.f32.mrf.mxu0
      %2316 = vmatprep.mubr.bf16.mxu0 0
      %2317 = vmatmul.mubr.bf16.gmra.mxu0 %v2034
      %v2318 = vpop.f32.mrf.mxu0
      %v2319 = vadd.f32 0.0, %v2318
      %v2320 = vpop.f32.mrf.mxu0
      %v2321 = vpop.f32.mrf.mxu0
      %v2322 = vadd.f32 0.0, %v2321
      %v2323 = vpop.f32.mrf.mxu0
      %2324 = vmatprep.mubr.bf16.mxu0 0
      %2325 = vmatmul.mubr.bf16.gmra.mxu0 %v2035
      %v2326 = vpop.f32.mrf.mxu0
      %v2327 = vadd.f32 0.0, %v2326
      %v2328 = vpop.f32.mrf.mxu0
      %v2329 = vpop.f32.mrf.mxu0
      %v2330 = vadd.f32 0.0, %v2329
      %v2331 = vpop.f32.mrf.mxu0
      %2332 = vmatprep.mubr.bf16.mxu0 0
      %2333 = vmatmul.mubr.bf16.gmra.mxu0 %v2036
      %v2334 = vpop.f32.mrf.mxu0
      %v2335 = vadd.f32 0.0, %v2334
      %v2336 = vpop.f32.mrf.mxu0
      %v2337 = vpop.f32.mrf.mxu0
      %v2338 = vadd.f32 0.0, %v2337
      %v2339 = vpop.f32.mrf.mxu0
      %2340 = vmatprep.mubr.bf16.mxu0 0
      %2341 = vmatmul.mubr.bf16.gmra.mxu0 %v2037
      %v2342 = vpop.f32.mrf.mxu0
      %v2343 = vadd.f32 0.0, %v2342
      %v2344 = vpop.f32.mrf.mxu0
      %v2345 = vpop.f32.mrf.mxu0
      %v2346 = vadd.f32 0.0, %v2345
      %v2347 = vpop.f32.mrf.mxu0
      %2348 = vmatprep.mubr.bf16.mxu0 0
      %2349 = vmatmul.mubr.bf16.gmra.mxu0 %v2038
      %v2350 = vpop.f32.mrf.mxu0
      %v2351 = vadd.f32 0.0, %v2350
      %v2352 = vpop.f32.mrf.mxu0
      %v2353 = vpop.f32.mrf.mxu0
      %v2354 = vadd.f32 0.0, %v2353
      %v2355 = vpop.f32.mrf.mxu0
      %2356 = vmatprep.mubr.bf16.mxu0 0
      %2357 = vmatmul.mubr.bf16.gmra.mxu0 %v2039
      %v2358 = vpop.f32.mrf.mxu0
      %v2359 = vadd.f32 0.0, %v2358
      %v2360 = vpop.f32.mrf.mxu0
      %v2361 = vpop.f32.mrf.mxu0
      %v2362 = vadd.f32 0.0, %v2361
      %v2363 = vpop.f32.mrf.mxu0
      %2364 = vmatprep.mubr.bf16.mxu0 0
      %2365 = vmatmul.mubr.bf16.gmra.mxu0 %v2040
      %v2366 = vpop.f32.mrf.mxu0
      %v2367 = vadd.f32 0.0, %v2366
      %v2368 = vpop.f32.mrf.mxu0
      %v2369 = vpop.f32.mrf.mxu0
      %v2370 = vadd.f32 0.0, %v2369
      %v2371 = vpop.f32.mrf.mxu0
      %2372 = vmatprep.mubr.bf16.mxu0 0
      %2373 = vmatmul.mubr.bf16.gmra.mxu0 %v2041
      %v2374 = vpop.f32.mrf.mxu0
      %v2375 = vadd.f32 0.0, %v2374
      %v2376 = vpop.f32.mrf.mxu0
      %v2377 = vpop.f32.mrf.mxu0
      %v2378 = vadd.f32 0.0, %v2377
      %v2379 = vpop.f32.mrf.mxu0
      %2380 = vmatprep.mubr.bf16.mxu0 0
      %2381 = vmatmul.mubr.bf16.gmra.mxu0 %v2042
      %v2382 = vpop.f32.mrf.mxu0
      %v2383 = vadd.f32 0.0, %v2382
      %v2384 = vpop.f32.mrf.mxu0
      %v2385 = vpop.f32.mrf.mxu0
      %v2386 = vadd.f32 0.0, %v2385
      %v2387 = vpop.f32.mrf.mxu0
      %2388 = vmatprep.mubr.bf16.mxu0 0
      %2389 = vmatmul.mubr.bf16.gmra.mxu0 %v2043
      %v2390 = vpop.f32.mrf.mxu0
      %v2391 = vadd.f32 0.0, %v2390
      %v2392 = vpop.f32.mrf.mxu0
      %v2393 = vpop.f32.mrf.mxu0
      %v2394 = vadd.f32 0.0, %v2393
      %v2395 = vpop.f32.mrf.mxu0
      %2396 = vdwg.mxu0
      %v2397 = vpack.c.bf16 %v2146, %v2143
      %v2398 = vpack.c.bf16 %v2154, %v2151
      %v2399 = vpack.c.bf16 %v2162, %v2159
      %v2400 = vpack.c.bf16 %v2170, %v2167
      %v2401 = vpack.c.bf16 %v2178, %v2175
      %v2402 = vpack.c.bf16 %v2186, %v2183
      %v2403 = vpack.c.bf16 %v2194, %v2191
      %v2404 = vpack.c.bf16 %v2202, %v2199
      %v2405 = vpack.c.bf16 %v2210, %v2207
      %v2406 = vpack.c.bf16 %v2218, %v2215
      %v2407 = vpack.c.bf16 %v2226, %v2223
      %v2408 = vpack.c.bf16 %v2234, %v2231
      %v2409 = vpack.c.bf16 %v2242, %v2239
      %v2410 = vpack.c.bf16 %v2250, %v2247
      %v2411 = vpack.c.bf16 %v2258, %v2255
      %v2412 = vpack.c.bf16 %v2266, %v2263
      %v2413 = vpack.c.bf16 %v2274, %v2271
      %v2414 = vpack.c.bf16 %v2282, %v2279
      %v2415 = vpack.c.bf16 %v2290, %v2287
      %v2416 = vpack.c.bf16 %v2298, %v2295
      %v2417 = vpack.c.bf16 %v2306, %v2303
      %v2418 = vpack.c.bf16 %v2314, %v2311
      %v2419 = vpack.c.bf16 %v2322, %v2319
      %v2420 = vpack.c.bf16 %v2330, %v2327
      %v2421 = vpack.c.bf16 %v2338, %v2335
      %v2422 = vpack.c.bf16 %v2346, %v2343
      %v2423 = vpack.c.bf16 %v2354, %v2351
      %v2424 = vpack.c.bf16 %v2362, %v2359
      %v2425 = vpack.c.bf16 %v2370, %v2367
      %v2426 = vpack.c.bf16 %v2378, %v2375
      %v2427 = vpack.c.bf16 %v2386, %v2383
      %v2428 = vpack.c.bf16 %v2394, %v2391
      %v2461 = vunpack.c.l.b16 %v2397
      %v2462 = vunpack.c.h.b16 %v2397
      %v2463 = vunpack.c.l.b16 %v2398
      %v2464 = vunpack.c.h.b16 %v2398
      %v2465 = vunpack.c.l.b16 %v2399
      %v2466 = vunpack.c.h.b16 %v2399
      %v2467 = vunpack.c.l.b16 %v2400
      %v2468 = vunpack.c.h.b16 %v2400
      %v2469 = vunpack.c.l.b16 %v2401
      %v2470 = vunpack.c.h.b16 %v2401
      %v2471 = vunpack.c.l.b16 %v2402
      %v2472 = vunpack.c.h.b16 %v2402
      %v2473 = vunpack.c.l.b16 %v2403
      %v2474 = vunpack.c.h.b16 %v2403
      %v2475 = vunpack.c.l.b16 %v2404
      %v2476 = vunpack.c.h.b16 %v2404
      %v2477 = vunpack.c.l.b16 %v2405
      %v2478 = vunpack.c.h.b16 %v2405
      %v2479 = vunpack.c.l.b16 %v2406
      %v2480 = vunpack.c.h.b16 %v2406
      %v2481 = vunpack.c.l.b16 %v2407
      %v2482 = vunpack.c.h.b16 %v2407
      %v2483 = vunpack.c.l.b16 %v2408
      %v2484 = vunpack.c.h.b16 %v2408
      %v2485 = vunpack.c.l.b16 %v2409
      %v2486 = vunpack.c.h.b16 %v2409
      %v2487 = vunpack.c.l.b16 %v2410
      %v2488 = vunpack.c.h.b16 %v2410
      %v2489 = vunpack.c.l.b16 %v2411
      %v2490 = vunpack.c.h.b16 %v2411
      %v2491 = vunpack.c.l.b16 %v2412
      %v2492 = vunpack.c.h.b16 %v2412
      %v2493 = vunpack.c.l.b16 %v2413
      %v2494 = vunpack.c.h.b16 %v2413
      %v2495 = vunpack.c.l.b16 %v2414
      %v2496 = vunpack.c.h.b16 %v2414
      %v2497 = vunpack.c.l.b16 %v2415
      %v2498 = vunpack.c.h.b16 %v2415
      %v2499 = vunpack.c.l.b16 %v2416
      %v2500 = vunpack.c.h.b16 %v2416
      %v2501 = vunpack.c.l.b16 %v2417
      %v2502 = vunpack.c.h.b16 %v2417
      %v2503 = vunpack.c.l.b16 %v2418
      %v2504 = vunpack.c.h.b16 %v2418
      %v2505 = vunpack.c.l.b16 %v2419
      %v2506 = vunpack.c.h.b16 %v2419
      %v2507 = vunpack.c.l.b16 %v2420
      %v2508 = vunpack.c.h.b16 %v2420
      %v2509 = vunpack.c.l.b16 %v2421
      %v2510 = vunpack.c.h.b16 %v2421
      %v2511 = vunpack.c.l.b16 %v2422
      %v2512 = vunpack.c.h.b16 %v2422
      %v2513 = vunpack.c.l.b16 %v2423
      %v2514 = vunpack.c.h.b16 %v2423
      %v2515 = vunpack.c.l.b16 %v2424
      %v2516 = vunpack.c.h.b16 %v2424
      %v2517 = vunpack.c.l.b16 %v2425
      %v2518 = vunpack.c.h.b16 %v2425
      %v2519 = vunpack.c.l.b16 %v2426
      %v2520 = vunpack.c.h.b16 %v2426
      %v2521 = vunpack.c.l.b16 %v2427
      %v2522 = vunpack.c.h.b16 %v2427
      %v2523 = vunpack.c.l.b16 %v2428
      %v2524 = vunpack.c.h.b16 %v2428
      %v2525 = vpack.c.b16 %v2461, %v2461
      %v2526 = vpack.c.b16 %v2462, %v2462
      %v2527 = vpack.c.b16 %v2463, %v2463
      %v2528 = vpack.c.b16 %v2464, %v2464
      %v2529 = vpack.c.b16 %v2465, %v2465
      %v2530 = vpack.c.b16 %v2466, %v2466
      %v2531 = vpack.c.b16 %v2467, %v2467
      %v2532 = vpack.c.b16 %v2468, %v2468
      %v2533 = vpack.c.b16 %v2469, %v2469
      %v2534 = vpack.c.b16 %v2470, %v2470
      %v2535 = vpack.c.b16 %v2471, %v2471
      %v2536 = vpack.c.b16 %v2472, %v2472
      %v2537 = vpack.c.b16 %v2473, %v2473
      %v2538 = vpack.c.b16 %v2474, %v2474
      %v2539 = vpack.c.b16 %v2475, %v2475
      %v2540 = vpack.c.b16 %v2476, %v2476
      %v2541 = vpack.c.b16 %v2477, %v2477
      %v2542 = vpack.c.b16 %v2478, %v2478
      %v2543 = vpack.c.b16 %v2479, %v2479
      %v2544 = vpack.c.b16 %v2480, %v2480
      %v2545 = vpack.c.b16 %v2481, %v2481
      %v2546 = vpack.c.b16 %v2482, %v2482
      %v2547 = vpack.c.b16 %v2483, %v2483
      %v2548 = vpack.c.b16 %v2484, %v2484
      %v2549 = vpack.c.b16 %v2485, %v2485
      %v2550 = vpack.c.b16 %v2486, %v2486
      %v2551 = vpack.c.b16 %v2487, %v2487
      %v2552 = vpack.c.b16 %v2488, %v2488
      %v2553 = vpack.c.b16 %v2489, %v2489
      %v2554 = vpack.c.b16 %v2490, %v2490
      %v2555 = vpack.c.b16 %v2491, %v2491
      %v2556 = vpack.c.b16 %v2492, %v2492
      %v2557 = vpack.c.b16 %v2493, %v2493
      %v2558 = vpack.c.b16 %v2494, %v2494
      %v2559 = vpack.c.b16 %v2495, %v2495
      %v2560 = vpack.c.b16 %v2496, %v2496
      %v2561 = vpack.c.b16 %v2497, %v2497
      %v2562 = vpack.c.b16 %v2498, %v2498
      %v2563 = vpack.c.b16 %v2499, %v2499
      %v2564 = vpack.c.b16 %v2500, %v2500
      %v2565 = vpack.c.b16 %v2501, %v2501
      %v2566 = vpack.c.b16 %v2502, %v2502
      %v2567 = vpack.c.b16 %v2503, %v2503
      %v2568 = vpack.c.b16 %v2504, %v2504
      %v2569 = vpack.c.b16 %v2505, %v2505
      %v2570 = vpack.c.b16 %v2506, %v2506
      %v2571 = vpack.c.b16 %v2507, %v2507
      %v2572 = vpack.c.b16 %v2508, %v2508
      %v2573 = vpack.c.b16 %v2509, %v2509
      %v2574 = vpack.c.b16 %v2510, %v2510
      %v2575 = vpack.c.b16 %v2511, %v2511
      %v2576 = vpack.c.b16 %v2512, %v2512
      %v2577 = vpack.c.b16 %v2513, %v2513
      %v2578 = vpack.c.b16 %v2514, %v2514
      %v2579 = vpack.c.b16 %v2515, %v2515
      %v2580 = vpack.c.b16 %v2516, %v2516
      %v2581 = vpack.c.b16 %v2517, %v2517
      %v2582 = vpack.c.b16 %v2518, %v2518
      %v2583 = vpack.c.b16 %v2519, %v2519
      %v2584 = vpack.c.b16 %v2520, %v2520
      %v2585 = vpack.c.b16 %v2521, %v2521
      %v2586 = vpack.c.b16 %v2522, %v2522
      %v2587 = vpack.c.b16 %v2523, %v2523
      %v2588 = vpack.c.b16 %v2524, %v2524
      %2653 = vst [vmem:[#allocation9] sm:$0xf] %v2525
      %2654 = vst [vmem:[#allocation9 + $0x4] sm:$0xf] %v2526
      %2655 = vst [vmem:[#allocation9 + $0x8] sm:$0xf] %v2527
      %2656 = vst [vmem:[#allocation9 + $0xc] sm:$0xf] %v2528
      %2657 = vst [vmem:[#allocation9 + $0x10] sm:$0xf] %v2529
      %2658 = vst [vmem:[#allocation9 + $0x14] sm:$0xf] %v2530
      %2659 = vst [vmem:[#allocation9 + $0x18] sm:$0xf] %v2531
      %2660 = vst [vmem:[#allocation9 + $0x1c] sm:$0xf] %v2532
      %2661 = vst [vmem:[#allocation9 + $0x20] sm:$0xf] %v2533
      %2662 = vst [vmem:[#allocation9 + $0x24] sm:$0xf] %v2534
      %2663 = vst [vmem:[#allocation9 + $0x28] sm:$0xf] %v2535
      %2664 = vst [vmem:[#allocation9 + $0x2c] sm:$0xf] %v2536
      %2665 = vst [vmem:[#allocation9 + $0x30] sm:$0xf] %v2537
      %2666 = vst [vmem:[#allocation9 + $0x34] sm:$0xf] %v2538
      %2667 = vst [vmem:[#allocation9 + $0x38] sm:$0xf] %v2539
      %2668 = vst [vmem:[#allocation9 + $0x3c] sm:$0xf] %v2540
      %2669 = vst [vmem:[#allocation9 + $0x40] sm:$0xf] %v2541
      %2670 = vst [vmem:[#allocation9 + $0x44] sm:$0xf] %v2542
      %2671 = vst [vmem:[#allocation9 + $0x48] sm:$0xf] %v2543
      %2672 = vst [vmem:[#allocation9 + $0x4c] sm:$0xf] %v2544
      %2673 = vst [vmem:[#allocation9 + $0x50] sm:$0xf] %v2545
      %2674 = vst [vmem:[#allocation9 + $0x54] sm:$0xf] %v2546
      %2675 = vst [vmem:[#allocation9 + $0x58] sm:$0xf] %v2547
      %2676 = vst [vmem:[#allocation9 + $0x5c] sm:$0xf] %v2548
      %2677 = vst [vmem:[#allocation9 + $0x60] sm:$0xf] %v2549
      %2678 = vst [vmem:[#allocation9 + $0x64] sm:$0xf] %v2550
      %2679 = vst [vmem:[#allocation9 + $0x68] sm:$0xf] %v2551
      %2680 = vst [vmem:[#allocation9 + $0x6c] sm:$0xf] %v2552
      %2681 = vst [vmem:[#allocation9 + $0x70] sm:$0xf] %v2553
      %2682 = vst [vmem:[#allocation9 + $0x74] sm:$0xf] %v2554
      %2683 = vst [vmem:[#allocation9 + $0x78] sm:$0xf] %v2555
      %2684 = vst [vmem:[#allocation9 + $0x7c] sm:$0xf] %v2556
      %2685 = vst [vmem:[#allocation9 + $0x80] sm:$0xf] %v2557
      %2686 = vst [vmem:[#allocation9 + $0x84] sm:$0xf] %v2558
      %2687 = vst [vmem:[#allocation9 + $0x88] sm:$0xf] %v2559
      %2688 = vst [vmem:[#allocation9 + $0x8c] sm:$0xf] %v2560
      %2689 = vst [vmem:[#allocation9 + $0x90] sm:$0xf] %v2561
      %2690 = vst [vmem:[#allocation9 + $0x94] sm:$0xf] %v2562
      %2691 = vst [vmem:[#allocation9 + $0x98] sm:$0xf] %v2563
      %2692 = vst [vmem:[#allocation9 + $0x9c] sm:$0xf] %v2564
      %2693 = vst [vmem:[#allocation9 + $0xa0] sm:$0xf] %v2565
      %2694 = vst [vmem:[#allocation9 + $0xa4] sm:$0xf] %v2566
      %2695 = vst [vmem:[#allocation9 + $0xa8] sm:$0xf] %v2567
      %2696 = vst [vmem:[#allocation9 + $0xac] sm:$0xf] %v2568
      %2697 = vst [vmem:[#allocation9 + $0xb0] sm:$0xf] %v2569
      %2698 = vst [vmem:[#allocation9 + $0xb4] sm:$0xf] %v2570
      %2699 = vst [vmem:[#allocation9 + $0xb8] sm:$0xf] %v2571
      %2700 = vst [vmem:[#allocation9 + $0xbc] sm:$0xf] %v2572
      %2701 = vst [vmem:[#allocation9 + $0xc0] sm:$0xf] %v2573
      %2702 = vst [vmem:[#allocation9 + $0xc4] sm:$0xf] %v2574
      %2703 = vst [vmem:[#allocation9 + $0xc8] sm:$0xf] %v2575
      %2704 = vst [vmem:[#allocation9 + $0xcc] sm:$0xf] %v2576
      %2705 = vst [vmem:[#allocation9 + $0xd0] sm:$0xf] %v2577
      %2706 = vst [vmem:[#allocation9 + $0xd4] sm:$0xf] %v2578
      %2707 = vst [vmem:[#allocation9 + $0xd8] sm:$0xf] %v2579
      %2708 = vst [vmem:[#allocation9 + $0xdc] sm:$0xf] %v2580
      %2709 = vst [vmem:[#allocation9 + $0xe0] sm:$0xf] %v2581
      %2710 = vst [vmem:[#allocation9 + $0xe4] sm:$0xf] %v2582
      %2711 = vst [vmem:[#allocation9 + $0xe8] sm:$0xf] %v2583
      %2712 = vst [vmem:[#allocation9 + $0xec] sm:$0xf] %v2584
      %2713 = vst [vmem:[#allocation9 + $0xf0] sm:$0xf] %v2585
      %2714 = vst [vmem:[#allocation9 + $0xf4] sm:$0xf] %v2586
      %2715 = vst [vmem:[#allocation9 + $0xf8] sm:$0xf] %v2587
      %2716 = vst [vmem:[#allocation9 + $0xfc] sm:$0xf] %v2588
    $region37: #{tpu_custom_call.1} parent=1 // pred_fallthru
      _
    // Predicated region
    $region38: #{tpu_custom_call.1} parent=1 // pred_check
      _
    $region39: #{tpu_custom_call.1} parent=1 // pred_check_branch
      %2718 = sbr.rel (0) target = $region41
    $region40: #{tpu_custom_call.1} parent=1 // pred_region
      %s2720 = ssub.s32 4096, 2432
      %2721 = vsyncadd [#allocation5], %s2720
      %s2722 = sshll.u32 [#allocation9], 4
      %s2723 = int_to_ptr.vmem [resolvable:$true] %s2722
      %2728 = dma.vmem_to_hbm [thread:$0]  %s2723, 2432, %s4, [#allocation5], 64, 64, 4
    $region41: #{tpu_custom_call.1} parent=1 // pred_fallthru
      _
    // Predicated region
    $region42: #{tpu_custom_call.1} parent=1 // pred_check
      _
    $region43: #{tpu_custom_call.1} parent=1 // pred_check_branch
      %2730 = sbr.rel (0) target = $region45
    $region44: #{tpu_custom_call.1} parent=1 // pred_region
      %2731 = dma.done [#allocation5], 4096
    $region45: #{tpu_custom_call.1} parent=1 // pred_fallthru
      _
    %2732 = vsyncpa [#allocation4], 1
    %2733 = vsyncpa [#allocation7], 1
    %2734 = vsyncpa [#allocation5], 1

</llo_original>
